<compile_context>
chip_gen: v6e
topology: v6e:2x2x1
jax: 0.10.0
libtpu: 0.0.40
codegen_flags: <defaults>
</compile_context>

<pallas_src>
import functools

import jax
import jax.numpy as jnp
from jax import lax
from jax.experimental import pallas as pl
from jax.experimental.pallas import tpu as pltpu


def _layernorm(x, gamma, beta, eps=1e-5):
    mu = jnp.mean(x, axis=-1, keepdims=True)
    var = jnp.mean((x - mu) ** 2, axis=-1, keepdims=True)
    return (x - mu) * lax.rsqrt(var + eps) * gamma + beta


def adaptive_state_kernel(
    x_ref,       # (B, S, H)  f32   batch-major sequence (no wrapper transpose)
    ctx_ref,     # (B, H)     f32
    wih0_ref,    # (H, 4H)    bf16  layer-0 input->gates   (pre-transposed)
    whh0_ref,    # (H, 4H)    bf16  layer-0 hidden->gates
    w1_ref,      # (2H, 4H)   bf16  layer-1 [W_ih ; W_hh] row-stacked
    b4h_ref,     # (2, 4H)    f32   row 0: fused layer-0 bias, row 1: fused layer-1 bias
    wsq_ref,     # (4H, H)    bf16  rows [0:2H]=compression W, [2H:3H]=imp W1, [3H:4H]=imp W2
    vec_ref,     # (8, H)     f32   rows: bcg,gcg,becg,bi1,bi2,gim,beim,state_importance
    alloc_ref,   # (1, L)     f32   memory_allocation buffer
    comp_out_ref, imp_out_ref, alloc_out_ref,
    *, hidden_dim, seq_len, adaptive_rate,
):
    H = hidden_dim
    S = seq_len
    B = x_ref.shape[0]
    f32 = jnp.float32
    cdt = wih0_ref.dtype           # MXU operand dtype (bf16); accumulation is f32

    wih0 = wih0_ref[...]
    whh0 = whh0_ref[...]
    w1 = w1_ref[...]
    b0 = b4h_ref[0:1, :]           # (1, 4H)
    b1 = b4h_ref[1:2, :]           # (1, 4H)

    # ---- hoisted layer-0 input projection: ONE matmul for all timesteps, bias folded
    xf = x_ref[...].reshape(B * S, H).astype(cdt)                   # layout-free merge
    xp = jnp.dot(xf, wih0, preferred_element_type=f32) + b0         # (B*S, 4H) f32
    xp = xp.reshape(B, S, 4 * H)                                    # layout-free split

    # hoist the layer-1 bias broadcast out of the (unrolled) loop
    b1b = jnp.broadcast_to(b1, (B, 4 * H))

    def gate_act(gates, c):
        # 3 EUP pushes per cell (1 sigmoid on the full (B,4H) vreg + 2 tanh)
        sig = jax.nn.sigmoid(gates)
        i = sig[:, 0:H]
        f = sig[:, H:2 * H]
        o = sig[:, 3 * H:4 * H]
        g = jnp.tanh(gates[:, 2 * H:3 * H])
        c_new = f * c + i * g
        h_new = o * jnp.tanh(c_new)
        return h_new, c_new

    zeros = jnp.zeros((B, H), f32)
    h0, c0, h1, c1 = zeros, zeros, zeros, zeros

    # statically unrolled time loop (S small & static): cross-step scheduling visibility
    for t in range(S):
        # layer 0: only the recurrent matmul remains on the serial chain
        g0 = xp[:, t, :] + jnp.dot(h0.astype(cdt), whh0,
                                   preferred_element_type=f32)
        h0, c0 = gate_act(g0, c0)
        # layer 1: single fused matmul over concat([h0, h1]) along the lane axis
        hcat = jnp.concatenate([h0, h1], axis=-1).astype(cdt)       # (B, 2H)
        g1 = jnp.dot(hcat, w1, preferred_element_type=f32) + b1b
        h1, c1 = gate_act(g1, c1)

    processed = h1                                                  # == h_state[-1]

    # ---- packed small parameters (slice the refs; rows are cheap sublane loads)
    bcg, gcg, becg = vec_ref[0:1, :], vec_ref[1:2, :], vec_ref[2:3, :]
    bi1, bi2 = vec_ref[3:4, :], vec_ref[4:5, :]
    gim, beim = vec_ref[5:6, :], vec_ref[6:7, :]
    imp_in = vec_ref[7:8, :]

    wcg = wsq_ref[0:2 * H, :]                                       # (2H, H)
    wi1 = wsq_ref[2 * H:3 * H, :]                                   # (H, H)
    wi2 = wsq_ref[3 * H:4 * H, :]                                   # (H, H)

    # compression gate: Linear(2H->H) on concat([processed, context]) -> LN -> Sigmoid
    pc = jnp.concatenate([processed, ctx_ref[...]], axis=-1).astype(cdt)
    cg_lin = jnp.dot(pc, wcg, preferred_element_type=f32) + bcg
    compression_signal = jax.nn.sigmoid(_layernorm(cg_lin, gcg, becg))
    compressed = processed * compression_signal
    comp_out_ref[...] = compressed

    # importance generator: Linear -> ReLU -> Linear -> LayerNorm -> Sigmoid
    hid = jnp.maximum(
        jnp.dot(compressed.astype(cdt), wi1, preferred_element_type=f32) + bi1, 0.0)
    imp_lin = jnp.dot(hid.astype(cdt), wi2, preferred_element_type=f32) + bi2
    importance = jax.nn.sigmoid(_layernorm(imp_lin, gim, beim))

    abs_imp = jnp.abs(importance)
    # memory_allocation += rate * (mean(|imp|) - mean(memory_allocation))   (matches torch)
    alloc_in = alloc_ref[...]
    alloc_out_ref[...] = alloc_in + adaptive_rate * (jnp.mean(abs_imp) - jnp.mean(alloc_in))
    # state_importance += rate * (mean_batch(|imp|) - state_importance)
    imp_out_ref[...] = imp_in + adaptive_rate * (
        jnp.mean(abs_imp, axis=0, keepdims=True) - imp_in)


def init_params(key, hidden_dim, memory_layers=2):
    """Deterministic synthetic parameters (PyTorch-style uniform init ranges)."""
    H = hidden_dim
    ks = list(jax.random.split(key, 16))
    u = lambda k, shape, bound: jax.random.uniform(
        k, shape, jnp.float32, minval=-bound, maxval=bound)
    bnd = 1.0 / (H ** 0.5)
    bnd2 = 1.0 / ((2 * H) ** 0.5)

    p = {}
    # LSTMCell layer 0 / 1 : weights pre-transposed to (in, 4H); biases fused (1, 4H)
    p["wih0"] = u(ks[0], (H, 4 * H), bnd)
    p["whh0"] = u(ks[1], (H, 4 * H), bnd)
    p["b0"] = u(ks[2], (1, 4 * H), bnd) + u(ks[3], (1, 4 * H), bnd)
    p["wih1"] = u(ks[4], (H, 4 * H), bnd)
    p["whh1"] = u(ks[5], (H, 4 * H), bnd)
    p["b1"] = u(ks[6], (1, 4 * H), bnd) + u(ks[7], (1, 4 * H), bnd)

    # compression gate Linear(2H -> H) (pre-transposed), LayerNorm affine
    p["wcg"] = u(ks[8], (2 * H, H), bnd2)
    p["bcg"] = u(ks[9], (1, H), bnd2)
    p["gcg"] = jnp.ones((1, H), jnp.float32)
    p["becg"] = jnp.zeros((1, H), jnp.float32)

    # importance generator: Linear(H->H) -> ReLU -> Linear(H->H) -> LN -> Sigmoid
    p["wi1"] = u(ks[10], (H, H), bnd)
    p["bi1"] = u(ks[11], (1, H), bnd)
    p["wi2"] = u(ks[12], (H, H), bnd)
    p["bi2"] = u(ks[13], (1, H), bnd)
    p["gim"] = jnp.ones((1, H), jnp.float32)
    p["beim"] = jnp.zeros((1, H), jnp.float32)

    # buffers
    p["state_importance"] = jnp.ones((1, H), jnp.float32)
    p["memory_allocation"] = jnp.ones((1, memory_layers), jnp.float32)
    return p


def pack_params(params, matmul_dtype=jnp.bfloat16):
    """One-time host-side packing: fewer, denser kernel inputs (fewer tiny DMAs).
    MXU operands are cast to bf16 (f32 accumulation in-kernel); everything touched
    by the VPU/EUP (biases, LayerNorm affine, buffers) stays f32."""
    return {
        "wih0": params["wih0"].astype(matmul_dtype),
        "whh0": params["whh0"].astype(matmul_dtype),
        "w1": jnp.concatenate([params["wih1"], params["whh1"]],
                              axis=0).astype(matmul_dtype),               # (2H, 4H)
        "b4h": jnp.concatenate([params["b0"], params["b1"]], axis=0),     # (2, 4H)
        "wsq": jnp.concatenate([params["wcg"], params["wi1"], params["wi2"]],
                               axis=0).astype(matmul_dtype),              # (4H, H)
        "vec": jnp.concatenate(
            [params["bcg"], params["gcg"], params["becg"],
             params["bi1"], params["bi2"], params["gim"], params["beim"],
             params["state_importance"]], axis=0),                       # (8, H)
        "alloc": params["memory_allocation"],                             # (1, L)
    }


@functools.partial(jax.jit, static_argnames=("adaptive_rate",))
def adaptive_state_manager(current_state, context, packed, adaptive_rate=0.01):
    """current_state: (B, S, H) f32 (batch-major, like the PyTorch forward);
    context: (B, H) f32.  Returns (compressed_state (B,H),
    new_state_importance (1,H), new_memory_allocation (1,L))."""
    B, S, H = current_state.shape
    L = packed["alloc"].shape[1]

    kernel = functools.partial(adaptive_state_kernel, hidden_dim=H, seq_len=S,
                               adaptive_rate=adaptive_rate)
    vmem = pl.BlockSpec(memory_space=pltpu.MemorySpace.VMEM)
    inputs = (current_state, context,
              packed["wih0"], packed["whh0"], packed["w1"], packed["b4h"],
              packed["wsq"], packed["vec"], packed["alloc"])

    # Latency-bound micro-kernel: everything is VMEM-resident, no grid/tiling needed.
    # TODO(synk): on v7x, if many independent instances are batched, add a leading
    # 'parallel' grid axis (or core_map) so the second TensorCore is not idle.
    return pl.pallas_call(
        kernel,
        out_shape=(
            jax.ShapeDtypeStruct((B, H), jnp.float32),   # compressed_state
            jax.ShapeDtypeStruct((1, H), jnp.float32),   # state_importance (updated)
            jax.ShapeDtypeStruct((1, L), jnp.float32),   # memory_allocation (updated)
        ),
        in_specs=[vmem] * len(inputs),
        out_specs=(vmem, vmem, vmem),
    )(*inputs)


if __name__ == "__main__":
    B, S, H = 2, 8, 32   # batch, seq, hidden (input_dim == hidden for the LSTMCell stack)
    key = jax.random.PRNGKey(0)
    k_x, k_ctx, k_p = jax.random.split(key, 3)

    current_state = jax.random.normal(k_x, (B, S, H), jnp.float32)
    context = jax.random.normal(k_ctx, (B, H), jnp.float32)
    params = init_params(k_p, H, memory_layers=2)
    packed = pack_params(params)

    compressed, state_importance, memory_allocation = jax.block_until_ready(
        adaptive_state_manager(current_state, context, packed, adaptive_rate=0.01))

    assert compressed.shape == (B, H)
    assert state_importance.shape == (1, H)
    assert memory_allocation.shape == (1, 2)
    print("KERNEL_OK")
</pallas_src>

<mosaic_0001>
module attributes {stable_mosaic.version = 11 : i64} {
  func.func @adaptive_state_kernel(%arg0: memref<2x8x32xf32, #tpu.memory_space<vmem>>, %arg1: memref<2x32xf32, #tpu.memory_space<vmem>>, %arg2: memref<32x128xbf16, #tpu.memory_space<vmem>>, %arg3: memref<32x128xbf16, #tpu.memory_space<vmem>>, %arg4: memref<64x128xbf16, #tpu.memory_space<vmem>>, %arg5: memref<2x128xf32, #tpu.memory_space<vmem>>, %arg6: memref<128x32xbf16, #tpu.memory_space<vmem>>, %arg7: memref<8x32xf32, #tpu.memory_space<vmem>>, %arg8: memref<1x2xf32, #tpu.memory_space<vmem>>, %arg9: memref<2x32xf32, #tpu.memory_space<vmem>>, %arg10: memref<1x32xf32, #tpu.memory_space<vmem>>, %arg11: memref<1x2xf32, #tpu.memory_space<vmem>>) attributes {dimension_semantics = [], scalar_prefetch = 0 : i64, scratch_operands = 0 : i64, tpu.core_type = #tpu.core_type<tc>} {
    %c0 = arith.constant 0 : index
    %c0_0 = arith.constant 0 : index
    %0 = vector.load %arg2[%c0, %c0_0] : memref<32x128xbf16, #tpu.memory_space<vmem>>, vector<32x128xbf16>
    %c0_1 = arith.constant 0 : index
    %c0_2 = arith.constant 0 : index
    %1 = vector.load %arg3[%c0_1, %c0_2] : memref<32x128xbf16, #tpu.memory_space<vmem>>, vector<32x128xbf16>
    %c0_3 = arith.constant 0 : index
    %c0_4 = arith.constant 0 : index
    %2 = vector.load %arg4[%c0_3, %c0_4] : memref<64x128xbf16, #tpu.memory_space<vmem>>, vector<64x128xbf16>
    %c0_5 = arith.constant 0 : index
    %c0_6 = arith.constant 0 : index
    %3 = vector.load %arg5[%c0_5, %c0_6] : memref<2x128xf32, #tpu.memory_space<vmem>>, vector<1x128xf32>
    %c1 = arith.constant 1 : index
    %c0_7 = arith.constant 0 : index
    %4 = vector.load %arg5[%c1, %c0_7] : memref<2x128xf32, #tpu.memory_space<vmem>>, vector<1x128xf32>
    %c0_8 = arith.constant 0 : index
    %c0_9 = arith.constant 0 : index
    %c0_10 = arith.constant 0 : index
    %5 = vector.load %arg0[%c0_8, %c0_9, %c0_10] : memref<2x8x32xf32, #tpu.memory_space<vmem>>, vector<2x8x32xf32>
    %6 = vector.shape_cast %5 : vector<2x8x32xf32> to vector<16x32xf32>
    %7 = arith.truncf %6 : vector<16x32xf32> to vector<16x32xbf16>
    %cst = arith.constant dense<0.000000e+00> : vector<16x128xf32>
    %8 = tpu.matmul %7, %0, %cst {dimension_numbers = #tpu.dot_dimension_numbers<[1], [0], [0], [1], [0, 0, 1, 1], [], []>} : vector<16x32xbf16>, vector<32x128xbf16>, vector<16x128xf32> -> vector<16x128xf32>
    %9 = vector.broadcast %3 : vector<1x128xf32> to vector<16x128xf32>
    %10 = arith.addf %8, %9 : vector<16x128xf32>
    %11 = vector.shape_cast %10 : vector<16x128xf32> to vector<2x8x128xf32>
    %12 = vector.shape_cast %4 : vector<1x128xf32> to vector<1x128xf32>
    %13 = vector.broadcast %12 : vector<1x128xf32> to vector<2x128xf32>
    %cst_11 = arith.constant 0.000000e+00 : f32
    %14 = vector.broadcast %cst_11 : f32 to vector<2x32xf32>
    %15 = vector.extract_strided_slice %11 {offsets = [0, 0, 0], sizes = [2, 1, 128], strides = [1, 1, 1]} : vector<2x8x128xf32> to vector<2x1x128xf32>
    %16 = vector.shape_cast %15 : vector<2x1x128xf32> to vector<2x128xf32>
    %17 = arith.truncf %14 : vector<2x32xf32> to vector<2x32xbf16>
    %cst_12 = arith.constant dense<0.000000e+00> : vector<2x128xf32>
    %18 = tpu.matmul %17, %1, %cst_12 {dimension_numbers = #tpu.dot_dimension_numbers<[1], [0], [0], [1], [0, 0, 1, 1], [], []>} : vector<2x32xbf16>, vector<32x128xbf16>, vector<2x128xf32> -> vector<2x128xf32>
    %19 = arith.addf %16, %18 : vector<2x128xf32>
    %20 = arith.negf %19 : vector<2x128xf32>
    %21 = math.exp %20 : vector<2x128xf32>
    %cst_13 = arith.constant 1.000000e+00 : f32
    %22 = vector.broadcast %cst_13 : f32 to vector<2x128xf32>
    %23 = arith.addf %22, %21 : vector<2x128xf32>
    %24 = arith.divf %22, %23 : vector<2x128xf32>
    %25 = vector.extract_strided_slice %24 {offsets = [0, 0], sizes = [2, 32], strides = [1, 1]} : vector<2x128xf32> to vector<2x32xf32>
    %26 = vector.extract_strided_slice %24 {offsets = [0, 32], sizes = [2, 32], strides = [1, 1]} : vector<2x128xf32> to vector<2x32xf32>
    %27 = vector.extract_strided_slice %24 {offsets = [0, 96], sizes = [2, 32], strides = [1, 1]} : vector<2x128xf32> to vector<2x32xf32>
    %28 = vector.extract_strided_slice %19 {offsets = [0, 64], sizes = [2, 32], strides = [1, 1]} : vector<2x128xf32> to vector<2x32xf32>
    %29 = math.tanh %28 : vector<2x32xf32>
    %30 = arith.mulf %26, %14 : vector<2x32xf32>
    %31 = arith.mulf %25, %29 : vector<2x32xf32>
    %32 = arith.addf %30, %31 : vector<2x32xf32>
    %33 = math.tanh %32 : vector<2x32xf32>
    %34 = arith.mulf %27, %33 : vector<2x32xf32>
    %35 = tpu.concatenate %34, %14 in 1 : vector<2x32xf32>, vector<2x32xf32> -> vector<2x64xf32>
    %36 = arith.truncf %35 : vector<2x64xf32> to vector<2x64xbf16>
    %cst_14 = arith.constant dense<0.000000e+00> : vector<2x128xf32>
    %37 = tpu.matmul %36, %2, %cst_14 {dimension_numbers = #tpu.dot_dimension_numbers<[1], [0], [0], [1], [0, 0, 1, 1], [], []>} : vector<2x64xbf16>, vector<64x128xbf16>, vector<2x128xf32> -> vector<2x128xf32>
    %38 = arith.addf %37, %13 : vector<2x128xf32>
    %39 = arith.negf %38 : vector<2x128xf32>
    %40 = math.exp %39 : vector<2x128xf32>
    %cst_15 = arith.constant 1.000000e+00 : f32
    %41 = vector.broadcast %cst_15 : f32 to vector<2x128xf32>
    %42 = arith.addf %41, %40 : vector<2x128xf32>
    %43 = arith.divf %41, %42 : vector<2x128xf32>
    %44 = vector.extract_strided_slice %43 {offsets = [0, 0], sizes = [2, 32], strides = [1, 1]} : vector<2x128xf32> to vector<2x32xf32>
    %45 = vector.extract_strided_slice %43 {offsets = [0, 32], sizes = [2, 32], strides = [1, 1]} : vector<2x128xf32> to vector<2x32xf32>
    %46 = vector.extract_strided_slice %43 {offsets = [0, 96], sizes = [2, 32], strides = [1, 1]} : vector<2x128xf32> to vector<2x32xf32>
    %47 = vector.extract_strided_slice %38 {offsets = [0, 64], sizes = [2, 32], strides = [1, 1]} : vector<2x128xf32> to vector<2x32xf32>
    %48 = math.tanh %47 : vector<2x32xf32>
    %49 = arith.mulf %45, %14 : vector<2x32xf32>
    %50 = arith.mulf %44, %48 : vector<2x32xf32>
    %51 = arith.addf %49, %50 : vector<2x32xf32>
    %52 = math.tanh %51 : vector<2x32xf32>
    %53 = arith.mulf %46, %52 : vector<2x32xf32>
    %54 = vector.extract_strided_slice %11 {offsets = [0, 1, 0], sizes = [2, 1, 128], strides = [1, 1, 1]} : vector<2x8x128xf32> to vector<2x1x128xf32>
    %55 = vector.shape_cast %54 : vector<2x1x128xf32> to vector<2x128xf32>
    %56 = arith.truncf %34 : vector<2x32xf32> to vector<2x32xbf16>
    %cst_16 = arith.constant dense<0.000000e+00> : vector<2x128xf32>
    %57 = tpu.matmul %56, %1, %cst_16 {dimension_numbers = #tpu.dot_dimension_numbers<[1], [0], [0], [1], [0, 0, 1, 1], [], []>} : vector<2x32xbf16>, vector<32x128xbf16>, vector<2x128xf32> -> vector<2x128xf32>
    %58 = arith.addf %55, %57 : vector<2x128xf32>
    %59 = arith.negf %58 : vector<2x128xf32>
    %60 = math.exp %59 : vector<2x128xf32>
    %cst_17 = arith.constant 1.000000e+00 : f32
    %61 = vector.broadcast %cst_17 : f32 to vector<2x128xf32>
    %62 = arith.addf %61, %60 : vector<2x128xf32>
    %63 = arith.divf %61, %62 : vector<2x128xf32>
    %64 = vector.extract_strided_slice %63 {offsets = [0, 0], sizes = [2, 32], strides = [1, 1]} : vector<2x128xf32> to vector<2x32xf32>
    %65 = vector.extract_strided_slice %63 {offsets = [0, 32], sizes = [2, 32], strides = [1, 1]} : vector<2x128xf32> to vector<2x32xf32>
    %66 = vector.extract_strided_slice %63 {offsets = [0, 96], sizes = [2, 32], strides = [1, 1]} : vector<2x128xf32> to vector<2x32xf32>
    %67 = vector.extract_strided_slice %58 {offsets = [0, 64], sizes = [2, 32], strides = [1, 1]} : vector<2x128xf32> to vector<2x32xf32>
    %68 = math.tanh %67 : vector<2x32xf32>
    %69 = arith.mulf %65, %32 : vector<2x32xf32>
    %70 = arith.mulf %64, %68 : vector<2x32xf32>
    %71 = arith.addf %69, %70 : vector<2x32xf32>
    %72 = math.tanh %71 : vector<2x32xf32>
    %73 = arith.mulf %66, %72 : vector<2x32xf32>
    %74 = tpu.concatenate %73, %53 in 1 : vector<2x32xf32>, vector<2x32xf32> -> vector<2x64xf32>
    %75 = arith.truncf %74 : vector<2x64xf32> to vector<2x64xbf16>
    %cst_18 = arith.constant dense<0.000000e+00> : vector<2x128xf32>
    %76 = tpu.matmul %75, %2, %cst_18 {dimension_numbers = #tpu.dot_dimension_numbers<[1], [0], [0], [1], [0, 0, 1, 1], [], []>} : vector<2x64xbf16>, vector<64x128xbf16>, vector<2x128xf32> -> vector<2x128xf32>
    %77 = arith.addf %76, %13 : vector<2x128xf32>
    %78 = arith.negf %77 : vector<2x128xf32>
    %79 = math.exp %78 : vector<2x128xf32>
    %cst_19 = arith.constant 1.000000e+00 : f32
    %80 = vector.broadcast %cst_19 : f32 to vector<2x128xf32>
    %81 = arith.addf %80, %79 : vector<2x128xf32>
    %82 = arith.divf %80, %81 : vector<2x128xf32>
    %83 = vector.extract_strided_slice %82 {offsets = [0, 0], sizes = [2, 32], strides = [1, 1]} : vector<2x128xf32> to vector<2x32xf32>
    %84 = vector.extract_strided_slice %82 {offsets = [0, 32], sizes = [2, 32], strides = [1, 1]} : vector<2x128xf32> to vector<2x32xf32>
    %85 = vector.extract_strided_slice %82 {offsets = [0, 96], sizes = [2, 32], strides = [1, 1]} : vector<2x128xf32> to vector<2x32xf32>
    %86 = vector.extract_strided_slice %77 {offsets = [0, 64], sizes = [2, 32], strides = [1, 1]} : vector<2x128xf32> to vector<2x32xf32>
    %87 = math.tanh %86 : vector<2x32xf32>
    %88 = arith.mulf %84, %51 : vector<2x32xf32>
    %89 = arith.mulf %83, %87 : vector<2x32xf32>
    %90 = arith.addf %88, %89 : vector<2x32xf32>
    %91 = math.tanh %90 : vector<2x32xf32>
    %92 = arith.mulf %85, %91 : vector<2x32xf32>
    %93 = vector.extract_strided_slice %11 {offsets = [0, 2, 0], sizes = [2, 1, 128], strides = [1, 1, 1]} : vector<2x8x128xf32> to vector<2x1x128xf32>
    %94 = vector.shape_cast %93 : vector<2x1x128xf32> to vector<2x128xf32>
    %95 = arith.truncf %73 : vector<2x32xf32> to vector<2x32xbf16>
    %cst_20 = arith.constant dense<0.000000e+00> : vector<2x128xf32>
    %96 = tpu.matmul %95, %1, %cst_20 {dimension_numbers = #tpu.dot_dimension_numbers<[1], [0], [0], [1], [0, 0, 1, 1], [], []>} : vector<2x32xbf16>, vector<32x128xbf16>, vector<2x128xf32> -> vector<2x128xf32>
    %97 = arith.addf %94, %96 : vector<2x128xf32>
    %98 = arith.negf %97 : vector<2x128xf32>
    %99 = math.exp %98 : vector<2x128xf32>
    %cst_21 = arith.constant 1.000000e+00 : f32
    %100 = vector.broadcast %cst_21 : f32 to vector<2x128xf32>
    %101 = arith.addf %100, %99 : vector<2x128xf32>
    %102 = arith.divf %100, %101 : vector<2x128xf32>
    %103 = vector.extract_strided_slice %102 {offsets = [0, 0], sizes = [2, 32], strides = [1, 1]} : vector<2x128xf32> to vector<2x32xf32>
    %104 = vector.extract_strided_slice %102 {offsets = [0, 32], sizes = [2, 32], strides = [1, 1]} : vector<2x128xf32> to vector<2x32xf32>
    %105 = vector.extract_strided_slice %102 {offsets = [0, 96], sizes = [2, 32], strides = [1, 1]} : vector<2x128xf32> to vector<2x32xf32>
    %106 = vector.extract_strided_slice %97 {offsets = [0, 64], sizes = [2, 32], strides = [1, 1]} : vector<2x128xf32> to vector<2x32xf32>
    %107 = math.tanh %106 : vector<2x32xf32>
    %108 = arith.mulf %104, %71 : vector<2x32xf32>
    %109 = arith.mulf %103, %107 : vector<2x32xf32>
    %110 = arith.addf %108, %109 : vector<2x32xf32>
    %111 = math.tanh %110 : vector<2x32xf32>
    %112 = arith.mulf %105, %111 : vector<2x32xf32>
    %113 = tpu.concatenate %112, %92 in 1 : vector<2x32xf32>, vector<2x32xf32> -> vector<2x64xf32>
    %114 = arith.truncf %113 : vector<2x64xf32> to vector<2x64xbf16>
    %cst_22 = arith.constant dense<0.000000e+00> : vector<2x128xf32>
    %115 = tpu.matmul %114, %2, %cst_22 {dimension_numbers = #tpu.dot_dimension_numbers<[1], [0], [0], [1], [0, 0, 1, 1], [], []>} : vector<2x64xbf16>, vector<64x128xbf16>, vector<2x128xf32> -> vector<2x128xf32>
    %116 = arith.addf %115, %13 : vector<2x128xf32>
    %117 = arith.negf %116 : vector<2x128xf32>
    %118 = math.exp %117 : vector<2x128xf32>
    %cst_23 = arith.constant 1.000000e+00 : f32
    %119 = vector.broadcast %cst_23 : f32 to vector<2x128xf32>
    %120 = arith.addf %119, %118 : vector<2x128xf32>
    %121 = arith.divf %119, %120 : vector<2x128xf32>
    %122 = vector.extract_strided_slice %121 {offsets = [0, 0], sizes = [2, 32], strides = [1, 1]} : vector<2x128xf32> to vector<2x32xf32>
    %123 = vector.extract_strided_slice %121 {offsets = [0, 32], sizes = [2, 32], strides = [1, 1]} : vector<2x128xf32> to vector<2x32xf32>
    %124 = vector.extract_strided_slice %121 {offsets = [0, 96], sizes = [2, 32], strides = [1, 1]} : vector<2x128xf32> to vector<2x32xf32>
    %125 = vector.extract_strided_slice %116 {offsets = [0, 64], sizes = [2, 32], strides = [1, 1]} : vector<2x128xf32> to vector<2x32xf32>
    %126 = math.tanh %125 : vector<2x32xf32>
    %127 = arith.mulf %123, %90 : vector<2x32xf32>
    %128 = arith.mulf %122, %126 : vector<2x32xf32>
    %129 = arith.addf %127, %128 : vector<2x32xf32>
    %130 = math.tanh %129 : vector<2x32xf32>
    %131 = arith.mulf %124, %130 : vector<2x32xf32>
    %132 = vector.extract_strided_slice %11 {offsets = [0, 3, 0], sizes = [2, 1, 128], strides = [1, 1, 1]} : vector<2x8x128xf32> to vector<2x1x128xf32>
    %133 = vector.shape_cast %132 : vector<2x1x128xf32> to vector<2x128xf32>
    %134 = arith.truncf %112 : vector<2x32xf32> to vector<2x32xbf16>
    %cst_24 = arith.constant dense<0.000000e+00> : vector<2x128xf32>
    %135 = tpu.matmul %134, %1, %cst_24 {dimension_numbers = #tpu.dot_dimension_numbers<[1], [0], [0], [1], [0, 0, 1, 1], [], []>} : vector<2x32xbf16>, vector<32x128xbf16>, vector<2x128xf32> -> vector<2x128xf32>
    %136 = arith.addf %133, %135 : vector<2x128xf32>
    %137 = arith.negf %136 : vector<2x128xf32>
    %138 = math.exp %137 : vector<2x128xf32>
    %cst_25 = arith.constant 1.000000e+00 : f32
    %139 = vector.broadcast %cst_25 : f32 to vector<2x128xf32>
    %140 = arith.addf %139, %138 : vector<2x128xf32>
    %141 = arith.divf %139, %140 : vector<2x128xf32>
    %142 = vector.extract_strided_slice %141 {offsets = [0, 0], sizes = [2, 32], strides = [1, 1]} : vector<2x128xf32> to vector<2x32xf32>
    %143 = vector.extract_strided_slice %141 {offsets = [0, 32], sizes = [2, 32], strides = [1, 1]} : vector<2x128xf32> to vector<2x32xf32>
    %144 = vector.extract_strided_slice %141 {offsets = [0, 96], sizes = [2, 32], strides = [1, 1]} : vector<2x128xf32> to vector<2x32xf32>
    %145 = vector.extract_strided_slice %136 {offsets = [0, 64], sizes = [2, 32], strides = [1, 1]} : vector<2x128xf32> to vector<2x32xf32>
    %146 = math.tanh %145 : vector<2x32xf32>
    %147 = arith.mulf %143, %110 : vector<2x32xf32>
    %148 = arith.mulf %142, %146 : vector<2x32xf32>
    %149 = arith.addf %147, %148 : vector<2x32xf32>
    %150 = math.tanh %149 : vector<2x32xf32>
    %151 = arith.mulf %144, %150 : vector<2x32xf32>
    %152 = tpu.concatenate %151, %131 in 1 : vector<2x32xf32>, vector<2x32xf32> -> vector<2x64xf32>
    %153 = arith.truncf %152 : vector<2x64xf32> to vector<2x64xbf16>
    %cst_26 = arith.constant dense<0.000000e+00> : vector<2x128xf32>
    %154 = tpu.matmul %153, %2, %cst_26 {dimension_numbers = #tpu.dot_dimension_numbers<[1], [0], [0], [1], [0, 0, 1, 1], [], []>} : vector<2x64xbf16>, vector<64x128xbf16>, vector<2x128xf32> -> vector<2x128xf32>
    %155 = arith.addf %154, %13 : vector<2x128xf32>
    %156 = arith.negf %155 : vector<2x128xf32>
    %157 = math.exp %156 : vector<2x128xf32>
    %cst_27 = arith.constant 1.000000e+00 : f32
    %158 = vector.broadcast %cst_27 : f32 to vector<2x128xf32>
    %159 = arith.addf %158, %157 : vector<2x128xf32>
    %160 = arith.divf %158, %159 : vector<2x128xf32>
    %161 = vector.extract_strided_slice %160 {offsets = [0, 0], sizes = [2, 32], strides = [1, 1]} : vector<2x128xf32> to vector<2x32xf32>
    %162 = vector.extract_strided_slice %160 {offsets = [0, 32], sizes = [2, 32], strides = [1, 1]} : vector<2x128xf32> to vector<2x32xf32>
    %163 = vector.extract_strided_slice %160 {offsets = [0, 96], sizes = [2, 32], strides = [1, 1]} : vector<2x128xf32> to vector<2x32xf32>
    %164 = vector.extract_strided_slice %155 {offsets = [0, 64], sizes = [2, 32], strides = [1, 1]} : vector<2x128xf32> to vector<2x32xf32>
    %165 = math.tanh %164 : vector<2x32xf32>
    %166 = arith.mulf %162, %129 : vector<2x32xf32>
    %167 = arith.mulf %161, %165 : vector<2x32xf32>
    %168 = arith.addf %166, %167 : vector<2x32xf32>
    %169 = math.tanh %168 : vector<2x32xf32>
    %170 = arith.mulf %163, %169 : vector<2x32xf32>
    %171 = vector.extract_strided_slice %11 {offsets = [0, 4, 0], sizes = [2, 1, 128], strides = [1, 1, 1]} : vector<2x8x128xf32> to vector<2x1x128xf32>
    %172 = vector.shape_cast %171 : vector<2x1x128xf32> to vector<2x128xf32>
    %173 = arith.truncf %151 : vector<2x32xf32> to vector<2x32xbf16>
    %cst_28 = arith.constant dense<0.000000e+00> : vector<2x128xf32>
    %174 = tpu.matmul %173, %1, %cst_28 {dimension_numbers = #tpu.dot_dimension_numbers<[1], [0], [0], [1], [0, 0, 1, 1], [], []>} : vector<2x32xbf16>, vector<32x128xbf16>, vector<2x128xf32> -> vector<2x128xf32>
    %175 = arith.addf %172, %174 : vector<2x128xf32>
    %176 = arith.negf %175 : vector<2x128xf32>
    %177 = math.exp %176 : vector<2x128xf32>
    %cst_29 = arith.constant 1.000000e+00 : f32
    %178 = vector.broadcast %cst_29 : f32 to vector<2x128xf32>
    %179 = arith.addf %178, %177 : vector<2x128xf32>
    %180 = arith.divf %178, %179 : vector<2x128xf32>
    %181 = vector.extract_strided_slice %180 {offsets = [0, 0], sizes = [2, 32], strides = [1, 1]} : vector<2x128xf32> to vector<2x32xf32>
    %182 = vector.extract_strided_slice %180 {offsets = [0, 32], sizes = [2, 32], strides = [1, 1]} : vector<2x128xf32> to vector<2x32xf32>
    %183 = vector.extract_strided_slice %180 {offsets = [0, 96], sizes = [2, 32], strides = [1, 1]} : vector<2x128xf32> to vector<2x32xf32>
    %184 = vector.extract_strided_slice %175 {offsets = [0, 64], sizes = [2, 32], strides = [1, 1]} : vector<2x128xf32> to vector<2x32xf32>
    %185 = math.tanh %184 : vector<2x32xf32>
    %186 = arith.mulf %182, %149 : vector<2x32xf32>
    %187 = arith.mulf %181, %185 : vector<2x32xf32>
    %188 = arith.addf %186, %187 : vector<2x32xf32>
    %189 = math.tanh %188 : vector<2x32xf32>
    %190 = arith.mulf %183, %189 : vector<2x32xf32>
    %191 = tpu.concatenate %190, %170 in 1 : vector<2x32xf32>, vector<2x32xf32> -> vector<2x64xf32>
    %192 = arith.truncf %191 : vector<2x64xf32> to vector<2x64xbf16>
    %cst_30 = arith.constant dense<0.000000e+00> : vector<2x128xf32>
    %193 = tpu.matmul %192, %2, %cst_30 {dimension_numbers = #tpu.dot_dimension_numbers<[1], [0], [0], [1], [0, 0, 1, 1], [], []>} : vector<2x64xbf16>, vector<64x128xbf16>, vector<2x128xf32> -> vector<2x128xf32>
    %194 = arith.addf %193, %13 : vector<2x128xf32>
    %195 = arith.negf %194 : vector<2x128xf32>
    %196 = math.exp %195 : vector<2x128xf32>
    %cst_31 = arith.constant 1.000000e+00 : f32
    %197 = vector.broadcast %cst_31 : f32 to vector<2x128xf32>
    %198 = arith.addf %197, %196 : vector<2x128xf32>
    %199 = arith.divf %197, %198 : vector<2x128xf32>
    %200 = vector.extract_strided_slice %199 {offsets = [0, 0], sizes = [2, 32], strides = [1, 1]} : vector<2x128xf32> to vector<2x32xf32>
    %201 = vector.extract_strided_slice %199 {offsets = [0, 32], sizes = [2, 32], strides = [1, 1]} : vector<2x128xf32> to vector<2x32xf32>
    %202 = vector.extract_strided_slice %199 {offsets = [0, 96], sizes = [2, 32], strides = [1, 1]} : vector<2x128xf32> to vector<2x32xf32>
    %203 = vector.extract_strided_slice %194 {offsets = [0, 64], sizes = [2, 32], strides = [1, 1]} : vector<2x128xf32> to vector<2x32xf32>
    %204 = math.tanh %203 : vector<2x32xf32>
    %205 = arith.mulf %201, %168 : vector<2x32xf32>
    %206 = arith.mulf %200, %204 : vector<2x32xf32>
    %207 = arith.addf %205, %206 : vector<2x32xf32>
    %208 = math.tanh %207 : vector<2x32xf32>
    %209 = arith.mulf %202, %208 : vector<2x32xf32>
    %210 = vector.extract_strided_slice %11 {offsets = [0, 5, 0], sizes = [2, 1, 128], strides = [1, 1, 1]} : vector<2x8x128xf32> to vector<2x1x128xf32>
    %211 = vector.shape_cast %210 : vector<2x1x128xf32> to vector<2x128xf32>
    %212 = arith.truncf %190 : vector<2x32xf32> to vector<2x32xbf16>
    %cst_32 = arith.constant dense<0.000000e+00> : vector<2x128xf32>
    %213 = tpu.matmul %212, %1, %cst_32 {dimension_numbers = #tpu.dot_dimension_numbers<[1], [0], [0], [1], [0, 0, 1, 1], [], []>} : vector<2x32xbf16>, vector<32x128xbf16>, vector<2x128xf32> -> vector<2x128xf32>
    %214 = arith.addf %211, %213 : vector<2x128xf32>
    %215 = arith.negf %214 : vector<2x128xf32>
    %216 = math.exp %215 : vector<2x128xf32>
    %cst_33 = arith.constant 1.000000e+00 : f32
    %217 = vector.broadcast %cst_33 : f32 to vector<2x128xf32>
    %218 = arith.addf %217, %216 : vector<2x128xf32>
    %219 = arith.divf %217, %218 : vector<2x128xf32>
    %220 = vector.extract_strided_slice %219 {offsets = [0, 0], sizes = [2, 32], strides = [1, 1]} : vector<2x128xf32> to vector<2x32xf32>
    %221 = vector.extract_strided_slice %219 {offsets = [0, 32], sizes = [2, 32], strides = [1, 1]} : vector<2x128xf32> to vector<2x32xf32>
    %222 = vector.extract_strided_slice %219 {offsets = [0, 96], sizes = [2, 32], strides = [1, 1]} : vector<2x128xf32> to vector<2x32xf32>
    %223 = vector.extract_strided_slice %214 {offsets = [0, 64], sizes = [2, 32], strides = [1, 1]} : vector<2x128xf32> to vector<2x32xf32>
    %224 = math.tanh %223 : vector<2x32xf32>
    %225 = arith.mulf %221, %188 : vector<2x32xf32>
    %226 = arith.mulf %220, %224 : vector<2x32xf32>
    %227 = arith.addf %225, %226 : vector<2x32xf32>
    %228 = math.tanh %227 : vector<2x32xf32>
    %229 = arith.mulf %222, %228 : vector<2x32xf32>
    %230 = tpu.concatenate %229, %209 in 1 : vector<2x32xf32>, vector<2x32xf32> -> vector<2x64xf32>
    %231 = arith.truncf %230 : vector<2x64xf32> to vector<2x64xbf16>
    %cst_34 = arith.constant dense<0.000000e+00> : vector<2x128xf32>
    %232 = tpu.matmul %231, %2, %cst_34 {dimension_numbers = #tpu.dot_dimension_numbers<[1], [0], [0], [1], [0, 0, 1, 1], [], []>} : vector<2x64xbf16>, vector<64x128xbf16>, vector<2x128xf32> -> vector<2x128xf32>
    %233 = arith.addf %232, %13 : vector<2x128xf32>
    %234 = arith.negf %233 : vector<2x128xf32>
    %235 = math.exp %234 : vector<2x128xf32>
    %cst_35 = arith.constant 1.000000e+00 : f32
    %236 = vector.broadcast %cst_35 : f32 to vector<2x128xf32>
    %237 = arith.addf %236, %235 : vector<2x128xf32>
    %238 = arith.divf %236, %237 : vector<2x128xf32>
    %239 = vector.extract_strided_slice %238 {offsets = [0, 0], sizes = [2, 32], strides = [1, 1]} : vector<2x128xf32> to vector<2x32xf32>
    %240 = vector.extract_strided_slice %238 {offsets = [0, 32], sizes = [2, 32], strides = [1, 1]} : vector<2x128xf32> to vector<2x32xf32>
    %241 = vector.extract_strided_slice %238 {offsets = [0, 96], sizes = [2, 32], strides = [1, 1]} : vector<2x128xf32> to vector<2x32xf32>
    %242 = vector.extract_strided_slice %233 {offsets = [0, 64], sizes = [2, 32], strides = [1, 1]} : vector<2x128xf32> to vector<2x32xf32>
    %243 = math.tanh %242 : vector<2x32xf32>
    %244 = arith.mulf %240, %207 : vector<2x32xf32>
    %245 = arith.mulf %239, %243 : vector<2x32xf32>
    %246 = arith.addf %244, %245 : vector<2x32xf32>
    %247 = math.tanh %246 : vector<2x32xf32>
    %248 = arith.mulf %241, %247 : vector<2x32xf32>
    %249 = vector.extract_strided_slice %11 {offsets = [0, 6, 0], sizes = [2, 1, 128], strides = [1, 1, 1]} : vector<2x8x128xf32> to vector<2x1x128xf32>
    %250 = vector.shape_cast %249 : vector<2x1x128xf32> to vector<2x128xf32>
    %251 = arith.truncf %229 : vector<2x32xf32> to vector<2x32xbf16>
    %cst_36 = arith.constant dense<0.000000e+00> : vector<2x128xf32>
    %252 = tpu.matmul %251, %1, %cst_36 {dimension_numbers = #tpu.dot_dimension_numbers<[1], [0], [0], [1], [0, 0, 1, 1], [], []>} : vector<2x32xbf16>, vector<32x128xbf16>, vector<2x128xf32> -> vector<2x128xf32>
    %253 = arith.addf %250, %252 : vector<2x128xf32>
    %254 = arith.negf %253 : vector<2x128xf32>
    %255 = math.exp %254 : vector<2x128xf32>
    %cst_37 = arith.constant 1.000000e+00 : f32
    %256 = vector.broadcast %cst_37 : f32 to vector<2x128xf32>
    %257 = arith.addf %256, %255 : vector<2x128xf32>
    %258 = arith.divf %256, %257 : vector<2x128xf32>
    %259 = vector.extract_strided_slice %258 {offsets = [0, 0], sizes = [2, 32], strides = [1, 1]} : vector<2x128xf32> to vector<2x32xf32>
    %260 = vector.extract_strided_slice %258 {offsets = [0, 32], sizes = [2, 32], strides = [1, 1]} : vector<2x128xf32> to vector<2x32xf32>
    %261 = vector.extract_strided_slice %258 {offsets = [0, 96], sizes = [2, 32], strides = [1, 1]} : vector<2x128xf32> to vector<2x32xf32>
    %262 = vector.extract_strided_slice %253 {offsets = [0, 64], sizes = [2, 32], strides = [1, 1]} : vector<2x128xf32> to vector<2x32xf32>
    %263 = math.tanh %262 : vector<2x32xf32>
    %264 = arith.mulf %260, %227 : vector<2x32xf32>
    %265 = arith.mulf %259, %263 : vector<2x32xf32>
    %266 = arith.addf %264, %265 : vector<2x32xf32>
    %267 = math.tanh %266 : vector<2x32xf32>
    %268 = arith.mulf %261, %267 : vector<2x32xf32>
    %269 = tpu.concatenate %268, %248 in 1 : vector<2x32xf32>, vector<2x32xf32> -> vector<2x64xf32>
    %270 = arith.truncf %269 : vector<2x64xf32> to vector<2x64xbf16>
    %cst_38 = arith.constant dense<0.000000e+00> : vector<2x128xf32>
    %271 = tpu.matmul %270, %2, %cst_38 {dimension_numbers = #tpu.dot_dimension_numbers<[1], [0], [0], [1], [0, 0, 1, 1], [], []>} : vector<2x64xbf16>, vector<64x128xbf16>, vector<2x128xf32> -> vector<2x128xf32>
    %272 = arith.addf %271, %13 : vector<2x128xf32>
    %273 = arith.negf %272 : vector<2x128xf32>
    %274 = math.exp %273 : vector<2x128xf32>
    %cst_39 = arith.constant 1.000000e+00 : f32
    %275 = vector.broadcast %cst_39 : f32 to vector<2x128xf32>
    %276 = arith.addf %275, %274 : vector<2x128xf32>
    %277 = arith.divf %275, %276 : vector<2x128xf32>
    %278 = vector.extract_strided_slice %277 {offsets = [0, 0], sizes = [2, 32], strides = [1, 1]} : vector<2x128xf32> to vector<2x32xf32>
    %279 = vector.extract_strided_slice %277 {offsets = [0, 32], sizes = [2, 32], strides = [1, 1]} : vector<2x128xf32> to vector<2x32xf32>
    %280 = vector.extract_strided_slice %277 {offsets = [0, 96], sizes = [2, 32], strides = [1, 1]} : vector<2x128xf32> to vector<2x32xf32>
    %281 = vector.extract_strided_slice %272 {offsets = [0, 64], sizes = [2, 32], strides = [1, 1]} : vector<2x128xf32> to vector<2x32xf32>
    %282 = math.tanh %281 : vector<2x32xf32>
    %283 = arith.mulf %279, %246 : vector<2x32xf32>
    %284 = arith.mulf %278, %282 : vector<2x32xf32>
    %285 = arith.addf %283, %284 : vector<2x32xf32>
    %286 = math.tanh %285 : vector<2x32xf32>
    %287 = arith.mulf %280, %286 : vector<2x32xf32>
    %288 = vector.extract_strided_slice %11 {offsets = [0, 7, 0], sizes = [2, 1, 128], strides = [1, 1, 1]} : vector<2x8x128xf32> to vector<2x1x128xf32>
    %289 = vector.shape_cast %288 : vector<2x1x128xf32> to vector<2x128xf32>
    %290 = arith.truncf %268 : vector<2x32xf32> to vector<2x32xbf16>
    %cst_40 = arith.constant dense<0.000000e+00> : vector<2x128xf32>
    %291 = tpu.matmul %290, %1, %cst_40 {dimension_numbers = #tpu.dot_dimension_numbers<[1], [0], [0], [1], [0, 0, 1, 1], [], []>} : vector<2x32xbf16>, vector<32x128xbf16>, vector<2x128xf32> -> vector<2x128xf32>
    %292 = arith.addf %289, %291 : vector<2x128xf32>
    %293 = arith.negf %292 : vector<2x128xf32>
    %294 = math.exp %293 : vector<2x128xf32>
    %cst_41 = arith.constant 1.000000e+00 : f32
    %295 = vector.broadcast %cst_41 : f32 to vector<2x128xf32>
    %296 = arith.addf %295, %294 : vector<2x128xf32>
    %297 = arith.divf %295, %296 : vector<2x128xf32>
    %298 = vector.extract_strided_slice %297 {offsets = [0, 0], sizes = [2, 32], strides = [1, 1]} : vector<2x128xf32> to vector<2x32xf32>
    %299 = vector.extract_strided_slice %297 {offsets = [0, 32], sizes = [2, 32], strides = [1, 1]} : vector<2x128xf32> to vector<2x32xf32>
    %300 = vector.extract_strided_slice %297 {offsets = [0, 96], sizes = [2, 32], strides = [1, 1]} : vector<2x128xf32> to vector<2x32xf32>
    %301 = vector.extract_strided_slice %292 {offsets = [0, 64], sizes = [2, 32], strides = [1, 1]} : vector<2x128xf32> to vector<2x32xf32>
    %302 = math.tanh %301 : vector<2x32xf32>
    %303 = arith.mulf %299, %266 : vector<2x32xf32>
    %304 = arith.mulf %298, %302 : vector<2x32xf32>
    %305 = arith.addf %303, %304 : vector<2x32xf32>
    %306 = math.tanh %305 : vector<2x32xf32>
    %307 = arith.mulf %300, %306 : vector<2x32xf32>
    %308 = tpu.concatenate %307, %287 in 1 : vector<2x32xf32>, vector<2x32xf32> -> vector<2x64xf32>
    %309 = arith.truncf %308 : vector<2x64xf32> to vector<2x64xbf16>
    %cst_42 = arith.constant dense<0.000000e+00> : vector<2x128xf32>
    %310 = tpu.matmul %309, %2, %cst_42 {dimension_numbers = #tpu.dot_dimension_numbers<[1], [0], [0], [1], [0, 0, 1, 1], [], []>} : vector<2x64xbf16>, vector<64x128xbf16>, vector<2x128xf32> -> vector<2x128xf32>
    %311 = arith.addf %310, %13 : vector<2x128xf32>
    %312 = arith.negf %311 : vector<2x128xf32>
    %313 = math.exp %312 : vector<2x128xf32>
    %cst_43 = arith.constant 1.000000e+00 : f32
    %314 = vector.broadcast %cst_43 : f32 to vector<2x128xf32>
    %315 = arith.addf %314, %313 : vector<2x128xf32>
    %316 = arith.divf %314, %315 : vector<2x128xf32>
    %317 = vector.extract_strided_slice %316 {offsets = [0, 0], sizes = [2, 32], strides = [1, 1]} : vector<2x128xf32> to vector<2x32xf32>
    %318 = vector.extract_strided_slice %316 {offsets = [0, 32], sizes = [2, 32], strides = [1, 1]} : vector<2x128xf32> to vector<2x32xf32>
    %319 = vector.extract_strided_slice %316 {offsets = [0, 96], sizes = [2, 32], strides = [1, 1]} : vector<2x128xf32> to vector<2x32xf32>
    %320 = vector.extract_strided_slice %311 {offsets = [0, 64], sizes = [2, 32], strides = [1, 1]} : vector<2x128xf32> to vector<2x32xf32>
    %321 = math.tanh %320 : vector<2x32xf32>
    %322 = arith.mulf %318, %285 : vector<2x32xf32>
    %323 = arith.mulf %317, %321 : vector<2x32xf32>
    %324 = arith.addf %322, %323 : vector<2x32xf32>
    %325 = math.tanh %324 : vector<2x32xf32>
    %326 = arith.mulf %319, %325 : vector<2x32xf32>
    %c0_44 = arith.constant 0 : index
    %c0_45 = arith.constant 0 : index
    %327 = vector.load %arg7[%c0_44, %c0_45] : memref<8x32xf32, #tpu.memory_space<vmem>>, vector<1x32xf32>
    %c1_46 = arith.constant 1 : index
    %c0_47 = arith.constant 0 : index
    %328 = vector.load %arg7[%c1_46, %c0_47] : memref<8x32xf32, #tpu.memory_space<vmem>>, vector<1x32xf32>
    %c2 = arith.constant 2 : index
    %c0_48 = arith.constant 0 : index
    %329 = vector.load %arg7[%c2, %c0_48] : memref<8x32xf32, #tpu.memory_space<vmem>>, vector<1x32xf32>
    %c3 = arith.constant 3 : index
    %c0_49 = arith.constant 0 : index
    %330 = vector.load %arg7[%c3, %c0_49] : memref<8x32xf32, #tpu.memory_space<vmem>>, vector<1x32xf32>
    %c4 = arith.constant 4 : index
    %c0_50 = arith.constant 0 : index
    %331 = vector.load %arg7[%c4, %c0_50] : memref<8x32xf32, #tpu.memory_space<vmem>>, vector<1x32xf32>
    %c5 = arith.constant 5 : index
    %c0_51 = arith.constant 0 : index
    %332 = vector.load %arg7[%c5, %c0_51] : memref<8x32xf32, #tpu.memory_space<vmem>>, vector<1x32xf32>
    %c6 = arith.constant 6 : index
    %c0_52 = arith.constant 0 : index
    %333 = vector.load %arg7[%c6, %c0_52] : memref<8x32xf32, #tpu.memory_space<vmem>>, vector<1x32xf32>
    %c7 = arith.constant 7 : index
    %c0_53 = arith.constant 0 : index
    %334 = vector.load %arg7[%c7, %c0_53] : memref<8x32xf32, #tpu.memory_space<vmem>>, vector<1x32xf32>
    %c0_54 = arith.constant 0 : index
    %c0_55 = arith.constant 0 : index
    %335 = vector.load %arg6[%c0_54, %c0_55] : memref<128x32xbf16, #tpu.memory_space<vmem>>, vector<64x32xbf16>
    %c64 = arith.constant 64 : index
    %c0_56 = arith.constant 0 : index
    %336 = vector.load %arg6[%c64, %c0_56] : memref<128x32xbf16, #tpu.memory_space<vmem>>, vector<32x32xbf16>
    %c96 = arith.constant 96 : index
    %c0_57 = arith.constant 0 : index
    %337 = vector.load %arg6[%c96, %c0_57] : memref<128x32xbf16, #tpu.memory_space<vmem>>, vector<32x32xbf16>
    %c0_58 = arith.constant 0 : index
    %c0_59 = arith.constant 0 : index
    %338 = vector.load %arg1[%c0_58, %c0_59] : memref<2x32xf32, #tpu.memory_space<vmem>>, vector<2x32xf32>
    %339 = tpu.concatenate %326, %338 in 1 : vector<2x32xf32>, vector<2x32xf32> -> vector<2x64xf32>
    %340 = arith.truncf %339 : vector<2x64xf32> to vector<2x64xbf16>
    %cst_60 = arith.constant dense<0.000000e+00> : vector<2x32xf32>
    %341 = tpu.matmul %340, %335, %cst_60 {dimension_numbers = #tpu.dot_dimension_numbers<[1], [0], [0], [1], [0, 0, 1, 1], [], []>} : vector<2x64xbf16>, vector<64x32xbf16>, vector<2x32xf32> -> vector<2x32xf32>
    %342 = vector.broadcast %327 : vector<1x32xf32> to vector<2x32xf32>
    %343 = arith.addf %341, %342 : vector<2x32xf32>
    %cst_61 = arith.constant dense<0.000000e+00> : vector<2xf32>
    %344 = vector.multi_reduction <add>, %343, %cst_61 [1] : vector<2x32xf32> to vector<2xf32>
    %345 = vector.shape_cast %344 : vector<2xf32> to vector<2x1xf32>
    %cst_62 = arith.constant 3.200000e+01 : f32
    %346 = vector.broadcast %cst_62 : f32 to vector<2x1xf32>
    %347 = arith.divf %345, %346 : vector<2x1xf32>
    %348 = vector.broadcast %347 : vector<2x1xf32> to vector<2x32xf32>
    %349 = arith.subf %343, %348 : vector<2x32xf32>
    %350 = arith.mulf %349, %349 : vector<2x32xf32>
    %cst_63 = arith.constant dense<0.000000e+00> : vector<2xf32>
    %351 = vector.multi_reduction <add>, %350, %cst_63 [1] : vector<2x32xf32> to vector<2xf32>
    %352 = vector.shape_cast %351 : vector<2xf32> to vector<2x1xf32>
    %cst_64 = arith.constant 3.200000e+01 : f32
    %353 = vector.broadcast %cst_64 : f32 to vector<2x1xf32>
    %354 = arith.divf %352, %353 : vector<2x1xf32>
    %355 = vector.broadcast %347 : vector<2x1xf32> to vector<2x32xf32>
    %356 = arith.subf %343, %355 : vector<2x32xf32>
    %cst_65 = arith.constant 9.99999974E-6 : f32
    %357 = vector.broadcast %cst_65 : f32 to vector<2x1xf32>
    %358 = arith.addf %354, %357 : vector<2x1xf32>
    %359 = math.rsqrt %358 : vector<2x1xf32>
    %360 = vector.broadcast %359 : vector<2x1xf32> to vector<2x32xf32>
    %361 = arith.mulf %356, %360 : vector<2x32xf32>
    %362 = vector.broadcast %328 : vector<1x32xf32> to vector<2x32xf32>
    %363 = arith.mulf %361, %362 : vector<2x32xf32>
    %364 = vector.broadcast %329 : vector<1x32xf32> to vector<2x32xf32>
    %365 = arith.addf %363, %364 : vector<2x32xf32>
    %366 = arith.negf %365 : vector<2x32xf32>
    %367 = math.exp %366 : vector<2x32xf32>
    %cst_66 = arith.constant 1.000000e+00 : f32
    %368 = vector.broadcast %cst_66 : f32 to vector<2x32xf32>
    %369 = arith.addf %368, %367 : vector<2x32xf32>
    %370 = arith.divf %368, %369 : vector<2x32xf32>
    %371 = arith.mulf %326, %370 : vector<2x32xf32>
    %c0_67 = arith.constant 0 : index
    %c0_68 = arith.constant 0 : index
    %372 = vector.load %arg9[%c0_67, %c0_68] : memref<2x32xf32, #tpu.memory_space<vmem>>, vector<2x32xf32>
    tpu.vector_store %arg9[%c0_67, %c0_68], %371 {strides = array<i32>} : memref<2x32xf32, #tpu.memory_space<vmem>>, vector<2x32xf32>,
    %373 = arith.truncf %371 : vector<2x32xf32> to vector<2x32xbf16>
    %cst_69 = arith.constant dense<0.000000e+00> : vector<2x32xf32>
    %374 = tpu.matmul %373, %336, %cst_69 {dimension_numbers = #tpu.dot_dimension_numbers<[1], [0], [0], [1], [0, 0, 1, 1], [], []>} : vector<2x32xbf16>, vector<32x32xbf16>, vector<2x32xf32> -> vector<2x32xf32>
    %375 = vector.broadcast %330 : vector<1x32xf32> to vector<2x32xf32>
    %376 = arith.addf %374, %375 : vector<2x32xf32>
    %cst_70 = arith.constant 0.000000e+00 : f32
    %377 = vector.broadcast %cst_70 : f32 to vector<2x32xf32>
    %378 = arith.maximumf %376, %377 : vector<2x32xf32>
    %379 = arith.truncf %378 : vector<2x32xf32> to vector<2x32xbf16>
    %cst_71 = arith.constant dense<0.000000e+00> : vector<2x32xf32>
    %380 = tpu.matmul %379, %337, %cst_71 {dimension_numbers = #tpu.dot_dimension_numbers<[1], [0], [0], [1], [0, 0, 1, 1], [], []>} : vector<2x32xbf16>, vector<32x32xbf16>, vector<2x32xf32> -> vector<2x32xf32>
    %381 = vector.broadcast %331 : vector<1x32xf32> to vector<2x32xf32>
    %382 = arith.addf %380, %381 : vector<2x32xf32>
    %cst_72 = arith.constant dense<0.000000e+00> : vector<2xf32>
    %383 = vector.multi_reduction <add>, %382, %cst_72 [1] : vector<2x32xf32> to vector<2xf32>
    %384 = vector.shape_cast %383 : vector<2xf32> to vector<2x1xf32>
    %cst_73 = arith.constant 3.200000e+01 : f32
    %385 = vector.broadcast %cst_73 : f32 to vector<2x1xf32>
    %386 = arith.divf %384, %385 : vector<2x1xf32>
    %387 = vector.broadcast %386 : vector<2x1xf32> to vector<2x32xf32>
    %388 = arith.subf %382, %387 : vector<2x32xf32>
    %389 = arith.mulf %388, %388 : vector<2x32xf32>
    %cst_74 = arith.constant dense<0.000000e+00> : vector<2xf32>
    %390 = vector.multi_reduction <add>, %389, %cst_74 [1] : vector<2x32xf32> to vector<2xf32>
    %391 = vector.shape_cast %390 : vector<2xf32> to vector<2x1xf32>
    %cst_75 = arith.constant 3.200000e+01 : f32
    %392 = vector.broadcast %cst_75 : f32 to vector<2x1xf32>
    %393 = arith.divf %391, %392 : vector<2x1xf32>
    %394 = vector.broadcast %386 : vector<2x1xf32> to vector<2x32xf32>
    %395 = arith.subf %382, %394 : vector<2x32xf32>
    %cst_76 = arith.constant 9.99999974E-6 : f32
    %396 = vector.broadcast %cst_76 : f32 to vector<2x1xf32>
    %397 = arith.addf %393, %396 : vector<2x1xf32>
    %398 = math.rsqrt %397 : vector<2x1xf32>
    %399 = vector.broadcast %398 : vector<2x1xf32> to vector<2x32xf32>
    %400 = arith.mulf %395, %399 : vector<2x32xf32>
    %401 = vector.broadcast %332 : vector<1x32xf32> to vector<2x32xf32>
    %402 = arith.mulf %400, %401 : vector<2x32xf32>
    %403 = vector.broadcast %333 : vector<1x32xf32> to vector<2x32xf32>
    %404 = arith.addf %402, %403 : vector<2x32xf32>
    %405 = arith.negf %404 : vector<2x32xf32>
    %406 = math.exp %405 : vector<2x32xf32>
    %cst_77 = arith.constant 1.000000e+00 : f32
    %407 = vector.broadcast %cst_77 : f32 to vector<2x32xf32>
    %408 = arith.addf %407, %406 : vector<2x32xf32>
    %409 = arith.divf %407, %408 : vector<2x32xf32>
    %410 = math.absf %409 : vector<2x32xf32>
    %c0_78 = arith.constant 0 : index
    %c0_79 = arith.constant 0 : index
    %411 = vector.load %arg8[%c0_78, %c0_79] : memref<1x2xf32, #tpu.memory_space<vmem>>, vector<1x2xf32>
    %412 = vector.shape_cast %410 : vector<2x32xf32> to vector<1x2x32xf32>
    %cst_80 = arith.constant dense<0.000000e+00> : vector<1xf32>
    %413 = vector.multi_reduction <add>, %412, %cst_80 [1, 2] : vector<1x2x32xf32> to vector<1xf32>
    %414 = vector.shape_cast %413 : vector<1xf32> to vector<1x1x1xf32>
    %415 = vector.extract %414[0, 0, 0] : f32 from vector<1x1x1xf32>
    %cst_81 = arith.constant 6.400000e+01 : f32
    %416 = arith.divf %415, %cst_81 : f32
    %417 = vector.shape_cast %411 : vector<1x2xf32> to vector<1x1x2xf32>
    %cst_82 = arith.constant dense<0.000000e+00> : vector<1xf32>
    %418 = vector.multi_reduction <add>, %417, %cst_82 [1, 2] : vector<1x1x2xf32> to vector<1xf32>
    %419 = vector.shape_cast %418 : vector<1xf32> to vector<1x1x1xf32>
    %420 = vector.extract %419[0, 0, 0] : f32 from vector<1x1x1xf32>
    %cst_83 = arith.constant 2.000000e+00 : f32
    %421 = arith.divf %420, %cst_83 : f32
    %422 = arith.subf %416, %421 : f32
    %cst_84 = arith.constant 0.00999999977 : f32
    %423 = arith.mulf %cst_84, %422 : f32
    %424 = vector.broadcast %423 : f32 to vector<1x2xf32>
    %425 = arith.addf %411, %424 : vector<1x2xf32>
    %c0_85 = arith.constant 0 : index
    %c0_86 = arith.constant 0 : index
    %426 = vector.load %arg11[%c0_85, %c0_86] : memref<1x2xf32, #tpu.memory_space<vmem>>, vector<1x2xf32>
    tpu.vector_store %arg11[%c0_85, %c0_86], %425 {strides = array<i32>} : memref<1x2xf32, #tpu.memory_space<vmem>>, vector<1x2xf32>,
    %cst_87 = arith.constant dense<0.000000e+00> : vector<32xf32>
    %427 = vector.multi_reduction <add>, %410, %cst_87 [0] : vector<2x32xf32> to vector<32xf32>
    %428 = vector.shape_cast %427 : vector<32xf32> to vector<1x32xf32>
    %cst_88 = arith.constant 2.000000e+00 : f32
    %429 = vector.broadcast %cst_88 : f32 to vector<1x32xf32>
    %430 = arith.divf %428, %429 : vector<1x32xf32>
    %431 = arith.subf %430, %334 : vector<1x32xf32>
    %cst_89 = arith.constant 0.00999999977 : f32
    %432 = vector.broadcast %cst_89 : f32 to vector<1x32xf32>
    %433 = arith.mulf %432, %431 : vector<1x32xf32>
    %434 = arith.addf %334, %433 : vector<1x32xf32>
    %c0_90 = arith.constant 0 : index
    %c0_91 = arith.constant 0 : index
    %435 = vector.load %arg10[%c0_90, %c0_91] : memref<1x32xf32, #tpu.memory_space<vmem>>, vector<1x32xf32>
    tpu.vector_store %arg10[%c0_90, %c0_91], %434 {strides = array<i32>} : memref<1x32xf32, #tpu.memory_space<vmem>>, vector<1x32xf32>,
    return
  }
}

</mosaic_0001>

<llo_original>
// kernel: adaptive_state_manager.1
$region0: #{adaptive_state_manager.1}
  #allocation0 [shape = 'u32[]', space=smem, size = 0x4, offset = 0x4, fixed_abs, tag = 'smem constant byte address 0x4 - core index']
  #allocation1 [shape = 'u32[144,128]{1,0:T(1,128)}', space=vmem, size = 0x12000, scoped, tag = 'internal scratch']
  %s0 = inlined_call_operand.vmem [shape: f32[2,8,32], index: 0, kind: input, shape index: {}]
  %s1 = inlined_call_operand.hbm [shape: f32[2,32], index: 1, kind: input, shape index: {}]
  %s2 = inlined_call_operand.vmem [shape: bf16[32,128], index: 2, kind: input, shape index: {}]
  %s3 = inlined_call_operand.vmem [shape: bf16[32,128], index: 3, kind: input, shape index: {}]
  %s4 = inlined_call_operand.vmem [shape: bf16[64,128], index: 4, kind: input, shape index: {}]
  %s5 = inlined_call_operand.vmem [shape: f32[2,128], index: 5, kind: input, shape index: {}]
  %s6 = inlined_call_operand.vmem [shape: bf16[128,32], index: 6, kind: input, shape index: {}]
  %s7 = inlined_call_operand.hbm [shape: f32[8,32], index: 7, kind: input, shape index: {}]
  %s8 = inlined_call_operand.vmem [shape: f32[1,2], index: 8, kind: input, shape index: {}]
  %s9 = inlined_call_operand.hbm [shape: f32[2,32], index: 9, kind: output, shape index: {0}]
  %s10 = inlined_call_operand.hbm [shape: f32[1,32], index: 10, kind: output, shape index: {1}]
  %s11 = inlined_call_operand.hbm [shape: f32[1,2], index: 11, kind: output, shape index: {2}]
  %12 = xla_tuple %s9, %s10, %s11
  %s13 = sld [smem:[#allocation0]]
  $region70: #{adaptive_state_manager.1} parent=0
    _
  %s15 = ssub.s32 1, %s13
  %s16 = scalar_select 0, %s15, %s13
  $region1: #{adaptive_state_manager.1} parent=0
    #allocation2 [shape = 'u8[1024]{0}', space=vmem, size = 0x400, scoped, tag = 'input window, operand 1, single buffered']
    #allocation3 [shape = 's32[1]{0}', space=sflag, size = 0x4, scoped, tag = 'scoped memory for adaptive_state_manager.1']
    #allocation4 [shape = 's32[1]{0}', space=sflag, size = 0x4, scoped, tag = 'scoped memory for adaptive_state_manager.1']
    #allocation5 [shape = 'u8[4096]{0}', space=vmem, size = 0x1000, scoped, tag = 'input window, operand 7, single buffered']
    #allocation6 [shape = 's32[1]{0}', space=sflag, size = 0x4, scoped, tag = 'scoped memory for adaptive_state_manager.1']
    #allocation7 [shape = 'u8[1024]{0}', space=vmem, size = 0x400, scoped, tag = 'output window, operand 0, single buffered']
    #allocation8 [shape = 'u8[512]{0}', space=vmem, size = 0x400, scoped, tag = 'output window, operand 1, single buffered']
    #allocation9 [shape = 's32[1]{0}', space=sflag, size = 0x4, scoped, tag = 'scoped memory for adaptive_state_manager.1']
    #allocation10 [shape = 'u8[512]{0}', space=vmem, size = 0x400, scoped, tag = 'output window, operand 2, single buffered']
    %17 = vsyncpa [#allocation3], 0
    %18 = vsyncpa [#allocation6], 0
    %19 = vsyncpa [#allocation4], 0
    %20 = vsyncpa [#allocation9], 0
    // Predicated region
    $region2: #{adaptive_state_manager.1} parent=1 // pred_check
      _
    $region3: #{adaptive_state_manager.1} parent=1 // pred_check_branch
      %22 = sbr.rel (0) target = $region5
    $region4: #{adaptive_state_manager.1} parent=1 // pred_region
      _
    $region5: #{adaptive_state_manager.1} parent=1 // pred_fallthru
      _
    // Predicated region
    $region6: #{adaptive_state_manager.1} parent=1 // pred_check
      _
    $region7: #{adaptive_state_manager.1} parent=1 // pred_check_branch
      %24 = sbr.rel (0) target = $region9
    $region8: #{adaptive_state_manager.1} parent=1 // pred_region
      %s26 = ssub.s32 32, 32
      %27 = vsyncadd [#allocation3], %s26
      %s29 = sshll.u32 [#allocation2], 4
      %s30 = int_to_ptr.vmem [resolvable:$true] %s29
      %32 = dma.hbm_to_vmem [thread:$0]  %s1, 32, %s30, [#allocation3]
    $region9: #{adaptive_state_manager.1} parent=1 // pred_fallthru
      _
    // Predicated region
    $region10: #{adaptive_state_manager.1} parent=1 // pred_check
      _
    $region11: #{adaptive_state_manager.1} parent=1 // pred_check_branch
      %34 = sbr.rel (0) target = $region13
    $region12: #{adaptive_state_manager.1} parent=1 // pred_region
      _
    $region13: #{adaptive_state_manager.1} parent=1 // pred_fallthru
      _
    // Predicated region
    $region14: #{adaptive_state_manager.1} parent=1 // pred_check
      _
    $region15: #{adaptive_state_manager.1} parent=1 // pred_check_branch
      %36 = sbr.rel (0) target = $region17
    $region16: #{adaptive_state_manager.1} parent=1 // pred_region
      _
    $region17: #{adaptive_state_manager.1} parent=1 // pred_fallthru
      _
    // Predicated region
    $region18: #{adaptive_state_manager.1} parent=1 // pred_check
      _
    $region19: #{adaptive_state_manager.1} parent=1 // pred_check_branch
      %38 = sbr.rel (0) target = $region21
    $region20: #{adaptive_state_manager.1} parent=1 // pred_region
      _
    $region21: #{adaptive_state_manager.1} parent=1 // pred_fallthru
      _
    // Predicated region
    $region22: #{adaptive_state_manager.1} parent=1 // pred_check
      _
    $region23: #{adaptive_state_manager.1} parent=1 // pred_check_branch
      %40 = sbr.rel (0) target = $region25
    $region24: #{adaptive_state_manager.1} parent=1 // pred_region
      _
    $region25: #{adaptive_state_manager.1} parent=1 // pred_fallthru
      _
    // Predicated region
    $region26: #{adaptive_state_manager.1} parent=1 // pred_check
      _
    $region27: #{adaptive_state_manager.1} parent=1 // pred_check_branch
      %42 = sbr.rel (0) target = $region29
    $region28: #{adaptive_state_manager.1} parent=1 // pred_region
      _
    $region29: #{adaptive_state_manager.1} parent=1 // pred_fallthru
      _
    // Predicated region
    $region30: #{adaptive_state_manager.1} parent=1 // pred_check
      _
    $region31: #{adaptive_state_manager.1} parent=1 // pred_check_branch
      %44 = sbr.rel (0) target = $region33
    $region32: #{adaptive_state_manager.1} parent=1 // pred_region
      %s46 = ssub.s32 128, 128
      %47 = vsyncadd [#allocation6], %s46
      %s49 = sshll.u32 [#allocation5], 4
      %s50 = int_to_ptr.vmem [resolvable:$true] %s49
      %52 = dma.hbm_to_vmem [thread:$0]  %s7, 128, %s50, [#allocation6]
    $region33: #{adaptive_state_manager.1} parent=1 // pred_fallthru
      _
    // Predicated region
    $region34: #{adaptive_state_manager.1} parent=1 // pred_check
      _
    $region35: #{adaptive_state_manager.1} parent=1 // pred_check_branch
      %54 = sbr.rel (0) target = $region37
    $region36: #{adaptive_state_manager.1} parent=1 // pred_region
      _
    $region37: #{adaptive_state_manager.1} parent=1 // pred_fallthru
      _
    // Predicated region
    $region38: #{adaptive_state_manager.1} parent=1 // pred_check
      _
    $region39: #{adaptive_state_manager.1} parent=1 // pred_check_branch
      %56 = sbr.rel (0) target = $region41
    $region40: #{adaptive_state_manager.1} parent=1 // pred_region
      %57 = dma.done [#allocation3], 32
    $region41: #{adaptive_state_manager.1} parent=1 // pred_fallthru
      _
    // Predicated region
    $region42: #{adaptive_state_manager.1} parent=1 // pred_check
      _
    $region43: #{adaptive_state_manager.1} parent=1 // pred_check_branch
      %59 = sbr.rel (0) target = $region45
    $region44: #{adaptive_state_manager.1} parent=1 // pred_region
      %60 = dma.done [#allocation6], 128
    $region45: #{adaptive_state_manager.1} parent=1 // pred_fallthru
      _
    %v62 = vld [vmem:[%s2] sm:$0xf]
    %v63 = vld [vmem:[%s2 + $0x4] sm:$0xf]
    %v64 = vld [vmem:[%s2 + $0x8] sm:$0xf]
    %v65 = vld [vmem:[%s2 + $0xc] sm:$0xf]
    %v66 = vld [vmem:[%s3] sm:$0xf]
    %v67 = vld [vmem:[%s3 + $0x4] sm:$0xf]
    %v68 = vld [vmem:[%s3 + $0x8] sm:$0xf]
    %v69 = vld [vmem:[%s3 + $0xc] sm:$0xf]
    %v70 = vld [vmem:[%s4] sm:$0xf]
    %v71 = vld [vmem:[%s4 + $0x4] sm:$0xf]
    %v72 = vld [vmem:[%s4 + $0x8] sm:$0xf]
    %v73 = vld [vmem:[%s4 + $0xc] sm:$0xf]
    %v74 = vld [vmem:[%s4 + $0x10] sm:$0xf]
    %v75 = vld [vmem:[%s4 + $0x14] sm:$0xf]
    %v76 = vld [vmem:[%s4 + $0x18] sm:$0xf]
    %v77 = vld [vmem:[%s4 + $0x1c] sm:$0xf]
    %v78 = vld [vmem:[%s5] sm:$0x1]
    %v79 = vld [vmem:[%s5 + $0x1] sm:$0x1]
    %v80 = vld [vmem:[%s0] sm:$0xff]
    %v81 = vld [vmem:[%s0 + $0x8] sm:$0xff]
    %v82 = vpack.c.bf16 %v81, %v80
    %v83 = vlaneseq
    %v84 = vshrl.u32 %v83, 7
    %v85 = vsub.s32 0, %v84
    %v86 = vrot.slane %v78, %v85
    %v91 = vunpack.c.l.b16 %v62
    %v92 = vunpack.c.l.b16 %v63
    %v93 = vunpack.c.l.b16 %v64
    %v94 = vunpack.c.l.b16 %v65
    %v95 = vpack.c.b16 %v92, %v91
    %v96 = vpack.c.b16 %v94, %v93
    %vm99 = vcmask 261120
    %v101 = vsel %vm99, %v82, 0
    %103 = vmatprep.subr.bf16.mxu0 0
    %104 = vmatpush1.bf16.msra.mxu0 0
    %105 = vmatprep.subr.bf16.mxu0 0
    %106 = vmatpush1.bf16.msra.mxu0 0
    %107 = vmatprep.subr.bf16.mxu0 0
    %108 = vmatpush1.bf16.msra.mxu0 0
    %109 = vmatprep.subr.bf16.mxu0 0
    %110 = vmatpush1.bf16.msra.mxu0 0
    %111 = vmatprep.subr.bf16.mxu0 0
    %112 = vmatpush1.bf16.msra.mxu0 0
    %113 = vmatprep.subr.bf16.mxu0 0
    %114 = vmatpush1.bf16.msra.mxu0 0
    %115 = vmatprep.subr.bf16.mxu0 0
    %116 = vmatpush1.bf16.msra.mxu0 %v96
    %117 = vmatprep.subr.bf16.mxu0 0
    %118 = vmatpush1.bf16.msra.mxu0 %v95
    %119 = vmatprep.subr.bf16.mxu0 0
    %120 = vmatpush2.bf16.msra.mxu0 0
    %121 = vmatprep.subr.bf16.mxu0 0
    %122 = vmatpush2.bf16.msra.mxu0 0
    %123 = vmatprep.subr.bf16.mxu0 0
    %124 = vmatpush2.bf16.msra.mxu0 0
    %125 = vmatprep.subr.bf16.mxu0 0
    %126 = vmatpush2.bf16.msra.mxu0 0
    %127 = vmatprep.subr.bf16.mxu0 0
    %128 = vmatpush2.bf16.msra.mxu0 0
    %129 = vmatprep.subr.bf16.mxu0 0
    %130 = vmatpush2.bf16.msra.mxu0 0
    %131 = vmatprep.subr.bf16.mxu0 0
    %132 = vmatpush2.bf16.msra.mxu0 0
    %133 = vmatprep.subr.bf16.mxu0 0
    %134 = vmatpush2.bf16.msra.mxu0 0
    %135 = vmatprep.mubr.bf16.mxu0 0
    %136 = vmatmul.mubr.bf16.gmra.mxu0 %v101
    %v137 = vpop.f32.mrf.mxu0
    %v138 = vadd.f32 %v86, %v137
    %v139 = vpop.f32.mrf.mxu0
    %v140 = vpop.f32.mrf.mxu0
    %v141 = vadd.f32 %v86, %v140
    %v142 = vpop.f32.mrf.mxu0
    %143 = vdwg.mxu0
    %v144 = vlaneseq
    %v145 = vshrl.u32 %v144, 7
    %v146 = vsub.s32 0, %v145
    %v147 = vrot.slane %v79, %v146
    %v152 = vunpack.c.l.b16 %v66
    %v153 = vunpack.c.l.b16 %v67
    %v154 = vunpack.c.l.b16 %v68
    %v155 = vunpack.c.l.b16 %v69
    %v156 = vpack.c.b16 %v153, %v152
    %v157 = vpack.c.b16 %v155, %v154
    %v161 = vsel %vm99, 0, 0
    %163 = vmatprep.subr.bf16.mxu0 0
    %164 = vmatpush1.bf16.msra.mxu0 0
    %165 = vmatprep.subr.bf16.mxu0 0
    %166 = vmatpush1.bf16.msra.mxu0 0
    %167 = vmatprep.subr.bf16.mxu0 0
    %168 = vmatpush1.bf16.msra.mxu0 0
    %169 = vmatprep.subr.bf16.mxu0 0
    %170 = vmatpush1.bf16.msra.mxu0 0
    %171 = vmatprep.subr.bf16.mxu0 0
    %172 = vmatpush1.bf16.msra.mxu0 0
    %173 = vmatprep.subr.bf16.mxu0 0
    %174 = vmatpush1.bf16.msra.mxu0 0
    %175 = vmatprep.subr.bf16.mxu0 0
    %176 = vmatpush1.bf16.msra.mxu0 %v157
    %177 = vmatprep.subr.bf16.mxu0 0
    %178 = vmatpush1.bf16.msra.mxu0 %v156
    %179 = vmatprep.subr.bf16.mxu0 0
    %180 = vmatpush2.bf16.msra.mxu0 0
    %181 = vmatprep.subr.bf16.mxu0 0
    %182 = vmatpush2.bf16.msra.mxu0 0
    %183 = vmatprep.subr.bf16.mxu0 0
    %184 = vmatpush2.bf16.msra.mxu0 0
    %185 = vmatprep.subr.bf16.mxu0 0
    %186 = vmatpush2.bf16.msra.mxu0 0
    %187 = vmatprep.subr.bf16.mxu0 0
    %188 = vmatpush2.bf16.msra.mxu0 0
    %189 = vmatprep.subr.bf16.mxu0 0
    %190 = vmatpush2.bf16.msra.mxu0 0
    %191 = vmatprep.subr.bf16.mxu0 0
    %192 = vmatpush2.bf16.msra.mxu0 0
    %193 = vmatprep.subr.bf16.mxu0 0
    %194 = vmatpush2.bf16.msra.mxu0 0
    %195 = vmatprep.mubr.bf16.mxu0 0
    %196 = vmatmul.mubr.bf16.gmra.mxu0 %v161
    %v197 = vpop.f32.mrf.mxu0
    %v198 = vadd.f32 0.0, %v197
    %v199 = vpop.f32.mrf.mxu0
    %v200 = vpop.f32.mrf.mxu0
    %v201 = vpop.f32.mrf.mxu0
    %202 = vdwg.mxu0
    %v204 = vrot.slane %v198, 1
    %v207 = vadd.f32 %v138, %v198
    %v208 = vadd.f32 %v141, %v204
    %v209 = vxor.u32 %v207, 2147483648
    %v210 = vxor.u32 %v208, 2147483648
    %v211 = vmul.f32 %v209, 1.442695
    %v212 = vpow.pop %v211
    %v213 = vmul.f32 %v210, 1.442695
    %v214 = vpow.pop %v213
    %v215 = vadd.f32 %v212, 1.0
    %v216 = vadd.f32 %v214, 1.0
    %v217 = vrcp.pop %v215
    %v218 = vmul.f32 1.0, %v217
    %v219 = vrcp.pop %v216
    %v220 = vmul.f32 1.0, %v219
    %v221 = vtanh.pop %v207
    %v222 = vtanh.pop %v208
    %v223 = vmul.f32 %v218, 0.0
    %v224 = vmul.f32 %v220, 0.0
    %227 = vrot.lane.b32.xlu0 %v221, 64
    %v228 = vpop.permute.xlu0 %227
    %229 = vrot.lane.b32.xlu0 %v222, 64
    %v230 = vpop.permute.xlu0 %229
    %v233 = vmul.f32 %v218, %v228
    %v234 = vmul.f32 %v220, %v230
    %237 = vrot.lane.b32.xlu0 %v233, 32
    %v238 = vpop.permute.xlu0 %237
    %239 = vrot.lane.b32.xlu0 %v234, 32
    %v240 = vpop.permute.xlu0 %239
    %v243 = vadd.f32 %v223, %v238
    %v244 = vadd.f32 %v224, %v240
    %v245 = vtanh.pop %v243
    %v246 = vtanh.pop %v244
    %249 = vrot.lane.b32.xlu0 %v245, 64
    %v250 = vpop.permute.xlu0 %249
    %251 = vrot.lane.b32.xlu0 %v246, 64
    %v252 = vpop.permute.xlu0 %251
    %v255 = vmul.f32 %v218, %v250
    %v256 = vmul.f32 %v220, %v252
    %v259 = vrot.slane %v256, 7
    %vm260 = vcmask 1041409
    %v261 = vsel %vm260, %v259, %v255
    %262 = vrot.lane.b32.xlu0 %v261, 32
    %v263 = vpop.permute.xlu0 %262
    %v265 = vsel %vm99, %v263, 0.0
    %v266 = vpack.c.bf16 %v265, %v265
    %v275 = vunpack.c.l.b16 %v70
    %v276 = vunpack.c.l.b16 %v71
    %v277 = vunpack.c.l.b16 %v72
    %v278 = vunpack.c.l.b16 %v73
    %v279 = vunpack.c.l.b16 %v74
    %v280 = vunpack.c.l.b16 %v75
    %v281 = vunpack.c.l.b16 %v76
    %v282 = vunpack.c.l.b16 %v77
    %v283 = vpack.c.b16 %v276, %v275
    %v284 = vpack.c.b16 %v278, %v277
    %v285 = vpack.c.b16 %v280, %v279
    %v286 = vpack.c.b16 %v282, %v281
    %vm291 = vcmask 523264
    %v293 = vsel %vm291, %v266, 0
    %295 = vmatprep.subr.bf16.mxu0 0
    %296 = vmatpush1.bf16.msra.mxu0 0
    %297 = vmatprep.subr.bf16.mxu0 0
    %298 = vmatpush1.bf16.msra.mxu0 0
    %299 = vmatprep.subr.bf16.mxu0 0
    %300 = vmatpush1.bf16.msra.mxu0 0
    %301 = vmatprep.subr.bf16.mxu0 0
    %302 = vmatpush1.bf16.msra.mxu0 0
    %303 = vmatprep.subr.bf16.mxu0 0
    %304 = vmatpush1.bf16.msra.mxu0 %v286
    %305 = vmatprep.subr.bf16.mxu0 0
    %306 = vmatpush1.bf16.msra.mxu0 %v285
    %307 = vmatprep.subr.bf16.mxu0 0
    %308 = vmatpush1.bf16.msra.mxu0 %v284
    %309 = vmatprep.subr.bf16.mxu0 0
    %310 = vmatpush1.bf16.msra.mxu0 %v283
    %311 = vmatprep.subr.bf16.mxu0 0
    %312 = vmatpush2.bf16.msra.mxu0 0
    %313 = vmatprep.subr.bf16.mxu0 0
    %314 = vmatpush2.bf16.msra.mxu0 0
    %315 = vmatprep.subr.bf16.mxu0 0
    %316 = vmatpush2.bf16.msra.mxu0 0
    %317 = vmatprep.subr.bf16.mxu0 0
    %318 = vmatpush2.bf16.msra.mxu0 0
    %319 = vmatprep.subr.bf16.mxu0 0
    %320 = vmatpush2.bf16.msra.mxu0 0
    %321 = vmatprep.subr.bf16.mxu0 0
    %322 = vmatpush2.bf16.msra.mxu0 0
    %323 = vmatprep.subr.bf16.mxu0 0
    %324 = vmatpush2.bf16.msra.mxu0 0
    %325 = vmatprep.subr.bf16.mxu0 0
    %326 = vmatpush2.bf16.msra.mxu0 0
    %327 = vmatprep.mubr.bf16.mxu0 0
    %328 = vmatmul.mubr.bf16.gmra.mxu0 %v293
    %v329 = vpop.f32.mrf.mxu0
    %v330 = vadd.f32 %v147, %v329
    %v331 = vpop.f32.mrf.mxu0
    %v332 = vpop.f32.mrf.mxu0
    %v333 = vpop.f32.mrf.mxu0
    %334 = vdwg.mxu0
    %v335 = vxor.u32 %v330, 2147483648
    %v336 = vmul.f32 %v335, 1.442695
    %v337 = vpow.pop %v336
    %v338 = vadd.f32 %v337, 1.0
    %v339 = vrcp.pop %v338
    %v340 = vmul.f32 1.0, %v339
    %v341 = vtanh.pop %v330
    %v342 = vmul.f32 %v340, 0.0
    %344 = vrot.lane.b32.xlu0 %v341, 64
    %v345 = vpop.permute.xlu0 %344
    %v347 = vmul.f32 %v340, %v345
    %349 = vrot.lane.b32.xlu0 %v347, 32
    %v350 = vpop.permute.xlu0 %349
    %v352 = vadd.f32 %v342, %v350
    %v353 = vtanh.pop %v352
    %355 = vrot.lane.b32.xlu0 %v353, 64
    %v356 = vpop.permute.xlu0 %355
    %v358 = vmul.f32 %v340, %v356
    %v359 = vpack.c.bf16 %v255, %v255
    %v360 = vpack.c.bf16 %v256, %v256
    %v363 = vunpack.c.l.b16 %v359
    %v364 = vunpack.c.l.b16 %v360
    %v365 = vrot.slane %v364, 7
    %v366 = vsel %vm260, %v365, %v363
    %v367 = vpack.c.b16 %v366, %v366
    %368 = vrot.lane.b32.xlu0 %v367, 32
    %v369 = vpop.permute.xlu0 %368
    %v371 = vsel %vm99, %v369, 0
    %373 = vmatprep.subr.bf16.mxu0 0
    %374 = vmatpush1.bf16.msra.mxu0 0
    %375 = vmatprep.subr.bf16.mxu0 0
    %376 = vmatpush1.bf16.msra.mxu0 0
    %377 = vmatprep.subr.bf16.mxu0 0
    %378 = vmatpush1.bf16.msra.mxu0 0
    %379 = vmatprep.subr.bf16.mxu0 0
    %380 = vmatpush1.bf16.msra.mxu0 0
    %381 = vmatprep.subr.bf16.mxu0 0
    %382 = vmatpush1.bf16.msra.mxu0 0
    %383 = vmatprep.subr.bf16.mxu0 0
    %384 = vmatpush1.bf16.msra.mxu0 0
    %385 = vmatprep.subr.bf16.mxu0 0
    %386 = vmatpush1.bf16.msra.mxu0 %v157
    %387 = vmatprep.subr.bf16.mxu0 0
    %388 = vmatpush1.bf16.msra.mxu0 %v156
    %389 = vmatprep.subr.bf16.mxu0 0
    %390 = vmatpush2.bf16.msra.mxu0 0
    %391 = vmatprep.subr.bf16.mxu0 0
    %392 = vmatpush2.bf16.msra.mxu0 0
    %393 = vmatprep.subr.bf16.mxu0 0
    %394 = vmatpush2.bf16.msra.mxu0 0
    %395 = vmatprep.subr.bf16.mxu0 0
    %396 = vmatpush2.bf16.msra.mxu0 0
    %397 = vmatprep.subr.bf16.mxu0 0
    %398 = vmatpush2.bf16.msra.mxu0 0
    %399 = vmatprep.subr.bf16.mxu0 0
    %400 = vmatpush2.bf16.msra.mxu0 0
    %401 = vmatprep.subr.bf16.mxu0 0
    %402 = vmatpush2.bf16.msra.mxu0 0
    %403 = vmatprep.subr.bf16.mxu0 0
    %404 = vmatpush2.bf16.msra.mxu0 0
    %405 = vmatprep.mubr.bf16.mxu0 0
    %406 = vmatmul.mubr.bf16.gmra.mxu0 %v371
    %v407 = vpop.f32.mrf.mxu0
    %v408 = vadd.f32 0.0, %v407
    %v409 = vpop.f32.mrf.mxu0
    %v410 = vpop.f32.mrf.mxu0
    %v411 = vpop.f32.mrf.mxu0
    %412 = vdwg.mxu0
    %v414 = vrot.slane %v408, 7
    %v417 = vadd.f32 %v138, %v414
    %v418 = vadd.f32 %v141, %v408
    %v419 = vxor.u32 %v417, 2147483648
    %v420 = vxor.u32 %v418, 2147483648
    %v421 = vmul.f32 %v419, 1.442695
    %v422 = vpow.pop %v421
    %v423 = vmul.f32 %v420, 1.442695
    %v424 = vpow.pop %v423
    %v425 = vadd.f32 %v422, 1.0
    %v426 = vadd.f32 %v424, 1.0
    %v427 = vrcp.pop %v425
    %v428 = vmul.f32 1.0, %v427
    %v429 = vrcp.pop %v426
    %v430 = vmul.f32 1.0, %v429
    %v431 = vtanh.pop %v417
    %v432 = vtanh.pop %v418
    %v435 = vrot.slane %v243, 7
    %v436 = vrot.slane %v244, 7
    %v439 = vmul.f32 %v428, %v435
    %v440 = vmul.f32 %v430, %v436
    %443 = vrot.lane.b32.xlu0 %v431, 64
    %v444 = vpop.permute.xlu0 %443
    %445 = vrot.lane.b32.xlu0 %v432, 64
    %v446 = vpop.permute.xlu0 %445
    %v449 = vmul.f32 %v428, %v444
    %v450 = vmul.f32 %v430, %v446
    %453 = vrot.lane.b32.xlu0 %v449, 32
    %v454 = vpop.permute.xlu0 %453
    %455 = vrot.lane.b32.xlu0 %v450, 32
    %v456 = vpop.permute.xlu0 %455
    %v459 = vadd.f32 %v439, %v454
    %v460 = vadd.f32 %v440, %v456
    %v461 = vtanh.pop %v459
    %v462 = vtanh.pop %v460
    %465 = vrot.lane.b32.xlu0 %v461, 64
    %v466 = vpop.permute.xlu0 %465
    %467 = vrot.lane.b32.xlu0 %v462, 64
    %v468 = vpop.permute.xlu0 %467
    %v471 = vmul.f32 %v428, %v466
    %v472 = vmul.f32 %v430, %v468
    %v475 = vrot.slane %v472, 7
    %vm476 = vcmask 1042434
    %v477 = vsel %vm476, %v475, %v471
    %478 = vrot.lane.b32.xlu0 %v477, 32
    %v479 = vpop.permute.xlu0 %478
    %v482 = vrot.slane %v358, 7
    %483 = vrot.lane.b32.xlu0 %v482, 64
    %v484 = vpop.permute.xlu0 %483
    %v486 = vsel %vm99, %v479, %v484
    %v487 = vpack.c.bf16 %v486, %v486
    %v489 = vshrl.u32 %v487, 16
    %v491 = vshll.u32 %v487, 16
    %v493 = vrot.slane %v491, 1
    %v494 = vor.u32 %v489, %v493
    %v496 = vsel %vm291, %v494, 0
    %498 = vmatprep.subr.bf16.mxu0 0
    %499 = vmatpush1.bf16.msra.mxu0 0
    %500 = vmatprep.subr.bf16.mxu0 0
    %501 = vmatpush1.bf16.msra.mxu0 0
    %502 = vmatprep.subr.bf16.mxu0 0
    %503 = vmatpush1.bf16.msra.mxu0 0
    %504 = vmatprep.subr.bf16.mxu0 0
    %505 = vmatpush1.bf16.msra.mxu0 0
    %506 = vmatprep.subr.bf16.mxu0 0
    %507 = vmatpush1.bf16.msra.mxu0 %v286
    %508 = vmatprep.subr.bf16.mxu0 0
    %509 = vmatpush1.bf16.msra.mxu0 %v285
    %510 = vmatprep.subr.bf16.mxu0 0
    %511 = vmatpush1.bf16.msra.mxu0 %v284
    %512 = vmatprep.subr.bf16.mxu0 0
    %513 = vmatpush1.bf16.msra.mxu0 %v283
    %514 = vmatprep.subr.bf16.mxu0 0
    %515 = vmatpush2.bf16.msra.mxu0 0
    %516 = vmatprep.subr.bf16.mxu0 0
    %517 = vmatpush2.bf16.msra.mxu0 0
    %518 = vmatprep.subr.bf16.mxu0 0
    %519 = vmatpush2.bf16.msra.mxu0 0
    %520 = vmatprep.subr.bf16.mxu0 0
    %521 = vmatpush2.bf16.msra.mxu0 0
    %522 = vmatprep.subr.bf16.mxu0 0
    %523 = vmatpush2.bf16.msra.mxu0 0
    %524 = vmatprep.subr.bf16.mxu0 0
    %525 = vmatpush2.bf16.msra.mxu0 0
    %526 = vmatprep.subr.bf16.mxu0 0
    %527 = vmatpush2.bf16.msra.mxu0 0
    %528 = vmatprep.subr.bf16.mxu0 0
    %529 = vmatpush2.bf16.msra.mxu0 0
    %530 = vmatprep.mubr.bf16.mxu0 0
    %531 = vmatmul.mubr.bf16.gmra.mxu0 %v496
    %v532 = vpop.f32.mrf.mxu0
    %v533 = vadd.f32 %v147, %v532
    %v534 = vpop.f32.mrf.mxu0
    %v535 = vpop.f32.mrf.mxu0
    %v536 = vpop.f32.mrf.mxu0
    %537 = vdwg.mxu0
    %v538 = vxor.u32 %v533, 2147483648
    %v539 = vmul.f32 %v538, 1.442695
    %v540 = vpow.pop %v539
    %v541 = vadd.f32 %v540, 1.0
    %v542 = vrcp.pop %v541
    %v543 = vmul.f32 1.0, %v542
    %v544 = vtanh.pop %v533
    %v545 = vmul.f32 %v543, %v352
    %547 = vrot.lane.b32.xlu0 %v544, 64
    %v548 = vpop.permute.xlu0 %547
    %v550 = vmul.f32 %v543, %v548
    %552 = vrot.lane.b32.xlu0 %v550, 32
    %v553 = vpop.permute.xlu0 %552
    %v555 = vadd.f32 %v545, %v553
    %v556 = vtanh.pop %v555
    %558 = vrot.lane.b32.xlu0 %v556, 64
    %v559 = vpop.permute.xlu0 %558
    %v561 = vmul.f32 %v543, %v559
    %v562 = vpack.c.bf16 %v471, %v471
    %v563 = vpack.c.bf16 %v472, %v472
    %v566 = vunpack.c.l.b16 %v562
    %v567 = vunpack.c.l.b16 %v563
    %v568 = vrot.slane %v566, 1
    %v569 = vsel %vm260, %v567, %v568
    %v570 = vpack.c.b16 %v569, %v569
    %571 = vrot.lane.b32.xlu0 %v570, 32
    %v572 = vpop.permute.xlu0 %571
    %v574 = vsel %vm99, %v572, 0
    %576 = vmatprep.subr.bf16.mxu0 0
    %577 = vmatpush1.bf16.msra.mxu0 0
    %578 = vmatprep.subr.bf16.mxu0 0
    %579 = vmatpush1.bf16.msra.mxu0 0
    %580 = vmatprep.subr.bf16.mxu0 0
    %581 = vmatpush1.bf16.msra.mxu0 0
    %582 = vmatprep.subr.bf16.mxu0 0
    %583 = vmatpush1.bf16.msra.mxu0 0
    %584 = vmatprep.subr.bf16.mxu0 0
    %585 = vmatpush1.bf16.msra.mxu0 0
    %586 = vmatprep.subr.bf16.mxu0 0
    %587 = vmatpush1.bf16.msra.mxu0 0
    %588 = vmatprep.subr.bf16.mxu0 0
    %589 = vmatpush1.bf16.msra.mxu0 %v157
    %590 = vmatprep.subr.bf16.mxu0 0
    %591 = vmatpush1.bf16.msra.mxu0 %v156
    %592 = vmatprep.subr.bf16.mxu0 0
    %593 = vmatpush2.bf16.msra.mxu0 0
    %594 = vmatprep.subr.bf16.mxu0 0
    %595 = vmatpush2.bf16.msra.mxu0 0
    %596 = vmatprep.subr.bf16.mxu0 0
    %597 = vmatpush2.bf16.msra.mxu0 0
    %598 = vmatprep.subr.bf16.mxu0 0
    %599 = vmatpush2.bf16.msra.mxu0 0
    %600 = vmatprep.subr.bf16.mxu0 0
    %601 = vmatpush2.bf16.msra.mxu0 0
    %602 = vmatprep.subr.bf16.mxu0 0
    %603 = vmatpush2.bf16.msra.mxu0 0
    %604 = vmatprep.subr.bf16.mxu0 0
    %605 = vmatpush2.bf16.msra.mxu0 0
    %606 = vmatprep.subr.bf16.mxu0 0
    %607 = vmatpush2.bf16.msra.mxu0 0
    %608 = vmatprep.mubr.bf16.mxu0 0
    %609 = vmatmul.mubr.bf16.gmra.mxu0 %v574
    %v610 = vpop.f32.mrf.mxu0
    %v611 = vadd.f32 0.0, %v610
    %v612 = vpop.f32.mrf.mxu0
    %v613 = vpop.f32.mrf.mxu0
    %v614 = vpop.f32.mrf.mxu0
    %615 = vdwg.mxu0
    %v617 = vrot.slane %v611, 6
    %v618 = vrot.slane %v611, 7
    %v621 = vadd.f32 %v138, %v617
    %v622 = vadd.f32 %v141, %v618
    %v623 = vxor.u32 %v621, 2147483648
    %v624 = vxor.u32 %v622, 2147483648
    %v625 = vmul.f32 %v623, 1.442695
    %v626 = vpow.pop %v625
    %v627 = vmul.f32 %v624, 1.442695
    %v628 = vpow.pop %v627
    %v629 = vadd.f32 %v626, 1.0
    %v630 = vadd.f32 %v628, 1.0
    %v631 = vrcp.pop %v629
    %v632 = vmul.f32 1.0, %v631
    %v633 = vrcp.pop %v630
    %v634 = vmul.f32 1.0, %v633
    %v635 = vtanh.pop %v621
    %v636 = vtanh.pop %v622
    %v639 = vrot.slane %v459, 7
    %v640 = vrot.slane %v460, 7
    %v643 = vmul.f32 %v632, %v639
    %v644 = vmul.f32 %v634, %v640
    %647 = vrot.lane.b32.xlu0 %v635, 64
    %v648 = vpop.permute.xlu0 %647
    %649 = vrot.lane.b32.xlu0 %v636, 64
    %v650 = vpop.permute.xlu0 %649
    %v653 = vmul.f32 %v632, %v648
    %v654 = vmul.f32 %v634, %v650
    %657 = vrot.lane.b32.xlu0 %v653, 32
    %v658 = vpop.permute.xlu0 %657
    %659 = vrot.lane.b32.xlu0 %v654, 32
    %v660 = vpop.permute.xlu0 %659
    %v663 = vadd.f32 %v643, %v658
    %v664 = vadd.f32 %v644, %v660
    %v665 = vtanh.pop %v663
    %v666 = vtanh.pop %v664
    %669 = vrot.lane.b32.xlu0 %v665, 64
    %v670 = vpop.permute.xlu0 %669
    %671 = vrot.lane.b32.xlu0 %v666, 64
    %v672 = vpop.permute.xlu0 %671
    %v675 = vmul.f32 %v632, %v670
    %v676 = vmul.f32 %v634, %v672
    %v679 = vrot.slane %v676, 7
    %vm680 = vcmask 1043459
    %v681 = vsel %vm680, %v679, %v675
    %682 = vrot.lane.b32.xlu0 %v681, 32
    %v683 = vpop.permute.xlu0 %682
    %v686 = vrot.slane %v561, 6
    %687 = vrot.lane.b32.xlu0 %v686, 64
    %v688 = vpop.permute.xlu0 %687
    %v690 = vsel %vm99, %v683, %v688
    %v691 = vpack.c.bf16 %v690, %v690
    %v693 = vrot.slane %v691, 1
    %v695 = vsel %vm291, %v693, 0
    %697 = vmatprep.subr.bf16.mxu0 0
    %698 = vmatpush1.bf16.msra.mxu0 0
    %699 = vmatprep.subr.bf16.mxu0 0
    %700 = vmatpush1.bf16.msra.mxu0 0
    %701 = vmatprep.subr.bf16.mxu0 0
    %702 = vmatpush1.bf16.msra.mxu0 0
    %703 = vmatprep.subr.bf16.mxu0 0
    %704 = vmatpush1.bf16.msra.mxu0 0
    %705 = vmatprep.subr.bf16.mxu0 0
    %706 = vmatpush1.bf16.msra.mxu0 %v286
    %707 = vmatprep.subr.bf16.mxu0 0
    %708 = vmatpush1.bf16.msra.mxu0 %v285
    %709 = vmatprep.subr.bf16.mxu0 0
    %710 = vmatpush1.bf16.msra.mxu0 %v284
    %711 = vmatprep.subr.bf16.mxu0 0
    %712 = vmatpush1.bf16.msra.mxu0 %v283
    %713 = vmatprep.subr.bf16.mxu0 0
    %714 = vmatpush2.bf16.msra.mxu0 0
    %715 = vmatprep.subr.bf16.mxu0 0
    %716 = vmatpush2.bf16.msra.mxu0 0
    %717 = vmatprep.subr.bf16.mxu0 0
    %718 = vmatpush2.bf16.msra.mxu0 0
    %719 = vmatprep.subr.bf16.mxu0 0
    %720 = vmatpush2.bf16.msra.mxu0 0
    %721 = vmatprep.subr.bf16.mxu0 0
    %722 = vmatpush2.bf16.msra.mxu0 0
    %723 = vmatprep.subr.bf16.mxu0 0
    %724 = vmatpush2.bf16.msra.mxu0 0
    %725 = vmatprep.subr.bf16.mxu0 0
    %726 = vmatpush2.bf16.msra.mxu0 0
    %727 = vmatprep.subr.bf16.mxu0 0
    %728 = vmatpush2.bf16.msra.mxu0 0
    %729 = vmatprep.mubr.bf16.mxu0 0
    %730 = vmatmul.mubr.bf16.gmra.mxu0 %v695
    %v731 = vpop.f32.mrf.mxu0
    %v732 = vadd.f32 %v147, %v731
    %v733 = vpop.f32.mrf.mxu0
    %v734 = vpop.f32.mrf.mxu0
    %v735 = vpop.f32.mrf.mxu0
    %736 = vdwg.mxu0
    %v737 = vxor.u32 %v732, 2147483648
    %v738 = vmul.f32 %v737, 1.442695
    %v739 = vpow.pop %v738
    %v740 = vadd.f32 %v739, 1.0
    %v741 = vrcp.pop %v740
    %v742 = vmul.f32 1.0, %v741
    %v743 = vtanh.pop %v732
    %v744 = vmul.f32 %v742, %v555
    %746 = vrot.lane.b32.xlu0 %v743, 64
    %v747 = vpop.permute.xlu0 %746
    %v749 = vmul.f32 %v742, %v747
    %751 = vrot.lane.b32.xlu0 %v749, 32
    %v752 = vpop.permute.xlu0 %751
    %v754 = vadd.f32 %v744, %v752
    %v755 = vtanh.pop %v754
    %757 = vrot.lane.b32.xlu0 %v755, 64
    %v758 = vpop.permute.xlu0 %757
    %v760 = vmul.f32 %v742, %v758
    %v761 = vpack.c.bf16 %v675, %v675
    %v762 = vpack.c.bf16 %v676, %v676
    %v765 = vunpack.c.l.b16 %v761
    %v766 = vunpack.c.l.b16 %v762
    %v767 = vrot.slane %v765, 2
    %v768 = vrot.slane %v766, 1
    %v769 = vsel %vm260, %v768, %v767
    %v770 = vpack.c.b16 %v769, %v769
    %771 = vrot.lane.b32.xlu0 %v770, 32
    %v772 = vpop.permute.xlu0 %771
    %v774 = vsel %vm99, %v772, 0
    %776 = vmatprep.subr.bf16.mxu0 0
    %777 = vmatpush1.bf16.msra.mxu0 0
    %778 = vmatprep.subr.bf16.mxu0 0
    %779 = vmatpush1.bf16.msra.mxu0 0
    %780 = vmatprep.subr.bf16.mxu0 0
    %781 = vmatpush1.bf16.msra.mxu0 0
    %782 = vmatprep.subr.bf16.mxu0 0
    %783 = vmatpush1.bf16.msra.mxu0 0
    %784 = vmatprep.subr.bf16.mxu0 0
    %785 = vmatpush1.bf16.msra.mxu0 0
    %786 = vmatprep.subr.bf16.mxu0 0
    %787 = vmatpush1.bf16.msra.mxu0 0
    %788 = vmatprep.subr.bf16.mxu0 0
    %789 = vmatpush1.bf16.msra.mxu0 %v157
    %790 = vmatprep.subr.bf16.mxu0 0
    %791 = vmatpush1.bf16.msra.mxu0 %v156
    %792 = vmatprep.subr.bf16.mxu0 0
    %793 = vmatpush2.bf16.msra.mxu0 0
    %794 = vmatprep.subr.bf16.mxu0 0
    %795 = vmatpush2.bf16.msra.mxu0 0
    %796 = vmatprep.subr.bf16.mxu0 0
    %797 = vmatpush2.bf16.msra.mxu0 0
    %798 = vmatprep.subr.bf16.mxu0 0
    %799 = vmatpush2.bf16.msra.mxu0 0
    %800 = vmatprep.subr.bf16.mxu0 0
    %801 = vmatpush2.bf16.msra.mxu0 0
    %802 = vmatprep.subr.bf16.mxu0 0
    %803 = vmatpush2.bf16.msra.mxu0 0
    %804 = vmatprep.subr.bf16.mxu0 0
    %805 = vmatpush2.bf16.msra.mxu0 0
    %806 = vmatprep.subr.bf16.mxu0 0
    %807 = vmatpush2.bf16.msra.mxu0 0
    %808 = vmatprep.mubr.bf16.mxu0 0
    %809 = vmatmul.mubr.bf16.gmra.mxu0 %v774
    %v810 = vpop.f32.mrf.mxu0
    %v811 = vadd.f32 0.0, %v810
    %v812 = vpop.f32.mrf.mxu0
    %v813 = vpop.f32.mrf.mxu0
    %v814 = vpop.f32.mrf.mxu0
    %815 = vdwg.mxu0
    %v817 = vrot.slane %v811, 5
    %v818 = vrot.slane %v811, 6
    %v821 = vadd.f32 %v138, %v817
    %v822 = vadd.f32 %v141, %v818
    %v823 = vxor.u32 %v821, 2147483648
    %v824 = vxor.u32 %v822, 2147483648
    %v825 = vmul.f32 %v823, 1.442695
    %v826 = vpow.pop %v825
    %v827 = vmul.f32 %v824, 1.442695
    %v828 = vpow.pop %v827
    %v829 = vadd.f32 %v826, 1.0
    %v830 = vadd.f32 %v828, 1.0
    %v831 = vrcp.pop %v829
    %v832 = vmul.f32 1.0, %v831
    %v833 = vrcp.pop %v830
    %v834 = vmul.f32 1.0, %v833
    %v835 = vtanh.pop %v821
    %v836 = vtanh.pop %v822
    %v839 = vrot.slane %v663, 7
    %v840 = vrot.slane %v664, 7
    %v843 = vmul.f32 %v832, %v839
    %v844 = vmul.f32 %v834, %v840
    %847 = vrot.lane.b32.xlu0 %v835, 64
    %v848 = vpop.permute.xlu0 %847
    %849 = vrot.lane.b32.xlu0 %v836, 64
    %v850 = vpop.permute.xlu0 %849
    %v853 = vmul.f32 %v832, %v848
    %v854 = vmul.f32 %v834, %v850
    %857 = vrot.lane.b32.xlu0 %v853, 32
    %v858 = vpop.permute.xlu0 %857
    %859 = vrot.lane.b32.xlu0 %v854, 32
    %v860 = vpop.permute.xlu0 %859
    %v863 = vadd.f32 %v843, %v858
    %v864 = vadd.f32 %v844, %v860
    %v865 = vtanh.pop %v863
    %v866 = vtanh.pop %v864
    %869 = vrot.lane.b32.xlu0 %v865, 64
    %v870 = vpop.permute.xlu0 %869
    %871 = vrot.lane.b32.xlu0 %v866, 64
    %v872 = vpop.permute.xlu0 %871
    %v875 = vmul.f32 %v832, %v870
    %v876 = vmul.f32 %v834, %v872
    %v879 = vrot.slane %v876, 7
    %vm880 = vcmask 1044484
    %v881 = vsel %vm880, %v879, %v875
    %882 = vrot.lane.b32.xlu0 %v881, 32
    %v883 = vpop.permute.xlu0 %882
    %v886 = vrot.slane %v760, 5
    %887 = vrot.lane.b32.xlu0 %v886, 64
    %v888 = vpop.permute.xlu0 %887
    %v890 = vsel %vm99, %v883, %v888
    %v891 = vpack.c.bf16 %v890, %v890
    %v893 = vshrl.u32 %v891, 16
    %v895 = vrot.slane %v893, 1
    %v896 = vshll.u32 %v891, 16
    %v898 = vrot.slane %v896, 2
    %v899 = vor.u32 %v895, %v898
    %v901 = vsel %vm291, %v899, 0
    %903 = vmatprep.subr.bf16.mxu0 0
    %904 = vmatpush1.bf16.msra.mxu0 0
    %905 = vmatprep.subr.bf16.mxu0 0
    %906 = vmatpush1.bf16.msra.mxu0 0
    %907 = vmatprep.subr.bf16.mxu0 0
    %908 = vmatpush1.bf16.msra.mxu0 0
    %909 = vmatprep.subr.bf16.mxu0 0
    %910 = vmatpush1.bf16.msra.mxu0 0
    %911 = vmatprep.subr.bf16.mxu0 0
    %912 = vmatpush1.bf16.msra.mxu0 %v286
    %913 = vmatprep.subr.bf16.mxu0 0
    %914 = vmatpush1.bf16.msra.mxu0 %v285
    %915 = vmatprep.subr.bf16.mxu0 0
    %916 = vmatpush1.bf16.msra.mxu0 %v284
    %917 = vmatprep.subr.bf16.mxu0 0
    %918 = vmatpush1.bf16.msra.mxu0 %v283
    %919 = vmatprep.subr.bf16.mxu0 0
    %920 = vmatpush2.bf16.msra.mxu0 0
    %921 = vmatprep.subr.bf16.mxu0 0
    %922 = vmatpush2.bf16.msra.mxu0 0
    %923 = vmatprep.subr.bf16.mxu0 0
    %924 = vmatpush2.bf16.msra.mxu0 0
    %925 = vmatprep.subr.bf16.mxu0 0
    %926 = vmatpush2.bf16.msra.mxu0 0
    %927 = vmatprep.subr.bf16.mxu0 0
    %928 = vmatpush2.bf16.msra.mxu0 0
    %929 = vmatprep.subr.bf16.mxu0 0
    %930 = vmatpush2.bf16.msra.mxu0 0
    %931 = vmatprep.subr.bf16.mxu0 0
    %932 = vmatpush2.bf16.msra.mxu0 0
    %933 = vmatprep.subr.bf16.mxu0 0
    %934 = vmatpush2.bf16.msra.mxu0 0
    %935 = vmatprep.mubr.bf16.mxu0 0
    %936 = vmatmul.mubr.bf16.gmra.mxu0 %v901
    %v937 = vpop.f32.mrf.mxu0
    %v938 = vadd.f32 %v147, %v937
    %v939 = vpop.f32.mrf.mxu0
    %v940 = vpop.f32.mrf.mxu0
    %v941 = vpop.f32.mrf.mxu0
    %942 = vdwg.mxu0
    %v943 = vxor.u32 %v938, 2147483648
    %v944 = vmul.f32 %v943, 1.442695
    %v945 = vpow.pop %v944
    %v946 = vadd.f32 %v945, 1.0
    %v947 = vrcp.pop %v946
    %v948 = vmul.f32 1.0, %v947
    %v949 = vtanh.pop %v938
    %v950 = vmul.f32 %v948, %v754
    %952 = vrot.lane.b32.xlu0 %v949, 64
    %v953 = vpop.permute.xlu0 %952
    %v955 = vmul.f32 %v948, %v953
    %957 = vrot.lane.b32.xlu0 %v955, 32
    %v958 = vpop.permute.xlu0 %957
    %v960 = vadd.f32 %v950, %v958
    %v961 = vtanh.pop %v960
    %963 = vrot.lane.b32.xlu0 %v961, 64
    %v964 = vpop.permute.xlu0 %963
    %v966 = vmul.f32 %v948, %v964
    %v967 = vpack.c.bf16 %v875, %v875
    %v968 = vpack.c.bf16 %v876, %v876
    %v971 = vunpack.c.l.b16 %v967
    %v972 = vunpack.c.l.b16 %v968
    %v973 = vrot.slane %v971, 3
    %v974 = vrot.slane %v972, 2
    %v975 = vsel %vm260, %v974, %v973
    %v976 = vpack.c.b16 %v975, %v975
    %977 = vrot.lane.b32.xlu0 %v976, 32
    %v978 = vpop.permute.xlu0 %977
    %v980 = vsel %vm99, %v978, 0
    %982 = vmatprep.subr.bf16.mxu0 0
    %983 = vmatpush1.bf16.msra.mxu0 0
    %984 = vmatprep.subr.bf16.mxu0 0
    %985 = vmatpush1.bf16.msra.mxu0 0
    %986 = vmatprep.subr.bf16.mxu0 0
    %987 = vmatpush1.bf16.msra.mxu0 0
    %988 = vmatprep.subr.bf16.mxu0 0
    %989 = vmatpush1.bf16.msra.mxu0 0
    %990 = vmatprep.subr.bf16.mxu0 0
    %991 = vmatpush1.bf16.msra.mxu0 0
    %992 = vmatprep.subr.bf16.mxu0 0
    %993 = vmatpush1.bf16.msra.mxu0 0
    %994 = vmatprep.subr.bf16.mxu0 0
    %995 = vmatpush1.bf16.msra.mxu0 %v157
    %996 = vmatprep.subr.bf16.mxu0 0
    %997 = vmatpush1.bf16.msra.mxu0 %v156
    %998 = vmatprep.subr.bf16.mxu0 0
    %999 = vmatpush2.bf16.msra.mxu0 0
    %1000 = vmatprep.subr.bf16.mxu0 0
    %1001 = vmatpush2.bf16.msra.mxu0 0
    %1002 = vmatprep.subr.bf16.mxu0 0
    %1003 = vmatpush2.bf16.msra.mxu0 0
    %1004 = vmatprep.subr.bf16.mxu0 0
    %1005 = vmatpush2.bf16.msra.mxu0 0
    %1006 = vmatprep.subr.bf16.mxu0 0
    %1007 = vmatpush2.bf16.msra.mxu0 0
    %1008 = vmatprep.subr.bf16.mxu0 0
    %1009 = vmatpush2.bf16.msra.mxu0 0
    %1010 = vmatprep.subr.bf16.mxu0 0
    %1011 = vmatpush2.bf16.msra.mxu0 0
    %1012 = vmatprep.subr.bf16.mxu0 0
    %1013 = vmatpush2.bf16.msra.mxu0 0
    %1014 = vmatprep.mubr.bf16.mxu0 0
    %1015 = vmatmul.mubr.bf16.gmra.mxu0 %v980
    %v1016 = vpop.f32.mrf.mxu0
    %v1017 = vadd.f32 0.0, %v1016
    %v1018 = vpop.f32.mrf.mxu0
    %v1019 = vpop.f32.mrf.mxu0
    %v1020 = vpop.f32.mrf.mxu0
    %1021 = vdwg.mxu0
    %v1023 = vrot.slane %v1017, 4
    %v1024 = vrot.slane %v1017, 5
    %v1027 = vadd.f32 %v138, %v1023
    %v1028 = vadd.f32 %v141, %v1024
    %v1029 = vxor.u32 %v1027, 2147483648
    %v1030 = vxor.u32 %v1028, 2147483648
    %v1031 = vmul.f32 %v1029, 1.442695
    %v1032 = vpow.pop %v1031
    %v1033 = vmul.f32 %v1030, 1.442695
    %v1034 = vpow.pop %v1033
    %v1035 = vadd.f32 %v1032, 1.0
    %v1036 = vadd.f32 %v1034, 1.0
    %v1037 = vrcp.pop %v1035
    %v1038 = vmul.f32 1.0, %v1037
    %v1039 = vrcp.pop %v1036
    %v1040 = vmul.f32 1.0, %v1039
    %v1041 = vtanh.pop %v1027
    %v1042 = vtanh.pop %v1028
    %v1045 = vrot.slane %v863, 7
    %v1046 = vrot.slane %v864, 7
    %v1049 = vmul.f32 %v1038, %v1045
    %v1050 = vmul.f32 %v1040, %v1046
    %1053 = vrot.lane.b32.xlu0 %v1041, 64
    %v1054 = vpop.permute.xlu0 %1053
    %1055 = vrot.lane.b32.xlu0 %v1042, 64
    %v1056 = vpop.permute.xlu0 %1055
    %v1059 = vmul.f32 %v1038, %v1054
    %v1060 = vmul.f32 %v1040, %v1056
    %1063 = vrot.lane.b32.xlu0 %v1059, 32
    %v1064 = vpop.permute.xlu0 %1063
    %1065 = vrot.lane.b32.xlu0 %v1060, 32
    %v1066 = vpop.permute.xlu0 %1065
    %v1069 = vadd.f32 %v1049, %v1064
    %v1070 = vadd.f32 %v1050, %v1066
    %v1071 = vtanh.pop %v1069
    %v1072 = vtanh.pop %v1070
    %1075 = vrot.lane.b32.xlu0 %v1071, 64
    %v1076 = vpop.permute.xlu0 %1075
    %1077 = vrot.lane.b32.xlu0 %v1072, 64
    %v1078 = vpop.permute.xlu0 %1077
    %v1081 = vmul.f32 %v1038, %v1076
    %v1082 = vmul.f32 %v1040, %v1078
    %v1085 = vrot.slane %v1082, 7
    %vm1086 = vcmask 1045509
    %v1087 = vsel %vm1086, %v1085, %v1081
    %1088 = vrot.lane.b32.xlu0 %v1087, 32
    %v1089 = vpop.permute.xlu0 %1088
    %v1092 = vrot.slane %v966, 4
    %1093 = vrot.lane.b32.xlu0 %v1092, 64
    %v1094 = vpop.permute.xlu0 %1093
    %v1096 = vsel %vm99, %v1089, %v1094
    %v1097 = vpack.c.bf16 %v1096, %v1096
    %v1099 = vrot.slane %v1097, 2
    %v1101 = vsel %vm291, %v1099, 0
    %1103 = vmatprep.subr.bf16.mxu0 0
    %1104 = vmatpush1.bf16.msra.mxu0 0
    %1105 = vmatprep.subr.bf16.mxu0 0
    %1106 = vmatpush1.bf16.msra.mxu0 0
    %1107 = vmatprep.subr.bf16.mxu0 0
    %1108 = vmatpush1.bf16.msra.mxu0 0
    %1109 = vmatprep.subr.bf16.mxu0 0
    %1110 = vmatpush1.bf16.msra.mxu0 0
    %1111 = vmatprep.subr.bf16.mxu0 0
    %1112 = vmatpush1.bf16.msra.mxu0 %v286
    %1113 = vmatprep.subr.bf16.mxu0 0
    %1114 = vmatpush1.bf16.msra.mxu0 %v285
    %1115 = vmatprep.subr.bf16.mxu0 0
    %1116 = vmatpush1.bf16.msra.mxu0 %v284
    %1117 = vmatprep.subr.bf16.mxu0 0
    %1118 = vmatpush1.bf16.msra.mxu0 %v283
    %1119 = vmatprep.subr.bf16.mxu0 0
    %1120 = vmatpush2.bf16.msra.mxu0 0
    %1121 = vmatprep.subr.bf16.mxu0 0
    %1122 = vmatpush2.bf16.msra.mxu0 0
    %1123 = vmatprep.subr.bf16.mxu0 0
    %1124 = vmatpush2.bf16.msra.mxu0 0
    %1125 = vmatprep.subr.bf16.mxu0 0
    %1126 = vmatpush2.bf16.msra.mxu0 0
    %1127 = vmatprep.subr.bf16.mxu0 0
    %1128 = vmatpush2.bf16.msra.mxu0 0
    %1129 = vmatprep.subr.bf16.mxu0 0
    %1130 = vmatpush2.bf16.msra.mxu0 0
    %1131 = vmatprep.subr.bf16.mxu0 0
    %1132 = vmatpush2.bf16.msra.mxu0 0
    %1133 = vmatprep.subr.bf16.mxu0 0
    %1134 = vmatpush2.bf16.msra.mxu0 0
    %1135 = vmatprep.mubr.bf16.mxu0 0
    %1136 = vmatmul.mubr.bf16.gmra.mxu0 %v1101
    %v1137 = vpop.f32.mrf.mxu0
    %v1138 = vadd.f32 %v147, %v1137
    %v1139 = vpop.f32.mrf.mxu0
    %v1140 = vpop.f32.mrf.mxu0
    %v1141 = vpop.f32.mrf.mxu0
    %1142 = vdwg.mxu0
    %v1143 = vxor.u32 %v1138, 2147483648
    %v1144 = vmul.f32 %v1143, 1.442695
    %v1145 = vpow.pop %v1144
    %v1146 = vadd.f32 %v1145, 1.0
    %v1147 = vrcp.pop %v1146
    %v1148 = vmul.f32 1.0, %v1147
    %v1149 = vtanh.pop %v1138
    %v1150 = vmul.f32 %v1148, %v960
    %1152 = vrot.lane.b32.xlu0 %v1149, 64
    %v1153 = vpop.permute.xlu0 %1152
    %v1155 = vmul.f32 %v1148, %v1153
    %1157 = vrot.lane.b32.xlu0 %v1155, 32
    %v1158 = vpop.permute.xlu0 %1157
    %v1160 = vadd.f32 %v1150, %v1158
    %v1161 = vtanh.pop %v1160
    %1163 = vrot.lane.b32.xlu0 %v1161, 64
    %v1164 = vpop.permute.xlu0 %1163
    %v1166 = vmul.f32 %v1148, %v1164
    %v1167 = vpack.c.bf16 %v1081, %v1081
    %v1168 = vpack.c.bf16 %v1082, %v1082
    %v1171 = vunpack.c.l.b16 %v1167
    %v1172 = vunpack.c.l.b16 %v1168
    %v1173 = vrot.slane %v1171, 4
    %v1174 = vrot.slane %v1172, 3
    %v1175 = vsel %vm260, %v1174, %v1173
    %v1176 = vpack.c.b16 %v1175, %v1175
    %1177 = vrot.lane.b32.xlu0 %v1176, 32
    %v1178 = vpop.permute.xlu0 %1177
    %v1180 = vsel %vm99, %v1178, 0
    %1182 = vmatprep.subr.bf16.mxu0 0
    %1183 = vmatpush1.bf16.msra.mxu0 0
    %1184 = vmatprep.subr.bf16.mxu0 0
    %1185 = vmatpush1.bf16.msra.mxu0 0
    %1186 = vmatprep.subr.bf16.mxu0 0
    %1187 = vmatpush1.bf16.msra.mxu0 0
    %1188 = vmatprep.subr.bf16.mxu0 0
    %1189 = vmatpush1.bf16.msra.mxu0 0
    %1190 = vmatprep.subr.bf16.mxu0 0
    %1191 = vmatpush1.bf16.msra.mxu0 0
    %1192 = vmatprep.subr.bf16.mxu0 0
    %1193 = vmatpush1.bf16.msra.mxu0 0
    %1194 = vmatprep.subr.bf16.mxu0 0
    %1195 = vmatpush1.bf16.msra.mxu0 %v157
    %1196 = vmatprep.subr.bf16.mxu0 0
    %1197 = vmatpush1.bf16.msra.mxu0 %v156
    %1198 = vmatprep.subr.bf16.mxu0 0
    %1199 = vmatpush2.bf16.msra.mxu0 0
    %1200 = vmatprep.subr.bf16.mxu0 0
    %1201 = vmatpush2.bf16.msra.mxu0 0
    %1202 = vmatprep.subr.bf16.mxu0 0
    %1203 = vmatpush2.bf16.msra.mxu0 0
    %1204 = vmatprep.subr.bf16.mxu0 0
    %1205 = vmatpush2.bf16.msra.mxu0 0
    %1206 = vmatprep.subr.bf16.mxu0 0
    %1207 = vmatpush2.bf16.msra.mxu0 0
    %1208 = vmatprep.subr.bf16.mxu0 0
    %1209 = vmatpush2.bf16.msra.mxu0 0
    %1210 = vmatprep.subr.bf16.mxu0 0
    %1211 = vmatpush2.bf16.msra.mxu0 0
    %1212 = vmatprep.subr.bf16.mxu0 0
    %1213 = vmatpush2.bf16.msra.mxu0 0
    %1214 = vmatprep.mubr.bf16.mxu0 0
    %1215 = vmatmul.mubr.bf16.gmra.mxu0 %v1180
    %v1216 = vpop.f32.mrf.mxu0
    %v1217 = vadd.f32 0.0, %v1216
    %v1218 = vpop.f32.mrf.mxu0
    %v1219 = vpop.f32.mrf.mxu0
    %v1220 = vpop.f32.mrf.mxu0
    %1221 = vdwg.mxu0
    %v1223 = vrot.slane %v1217, 3
    %v1224 = vrot.slane %v1217, 4
    %v1227 = vadd.f32 %v138, %v1223
    %v1228 = vadd.f32 %v141, %v1224
    %v1229 = vxor.u32 %v1227, 2147483648
    %v1230 = vxor.u32 %v1228, 2147483648
    %v1231 = vmul.f32 %v1229, 1.442695
    %v1232 = vpow.pop %v1231
    %v1233 = vmul.f32 %v1230, 1.442695
    %v1234 = vpow.pop %v1233
    %v1235 = vadd.f32 %v1232, 1.0
    %v1236 = vadd.f32 %v1234, 1.0
    %v1237 = vrcp.pop %v1235
    %v1238 = vmul.f32 1.0, %v1237
    %v1239 = vrcp.pop %v1236
    %v1240 = vmul.f32 1.0, %v1239
    %v1241 = vtanh.pop %v1227
    %v1242 = vtanh.pop %v1228
    %v1245 = vrot.slane %v1069, 7
    %v1246 = vrot.slane %v1070, 7
    %v1249 = vmul.f32 %v1238, %v1245
    %v1250 = vmul.f32 %v1240, %v1246
    %1253 = vrot.lane.b32.xlu0 %v1241, 64
    %v1254 = vpop.permute.xlu0 %1253
    %1255 = vrot.lane.b32.xlu0 %v1242, 64
    %v1256 = vpop.permute.xlu0 %1255
    %v1259 = vmul.f32 %v1238, %v1254
    %v1260 = vmul.f32 %v1240, %v1256
    %1263 = vrot.lane.b32.xlu0 %v1259, 32
    %v1264 = vpop.permute.xlu0 %1263
    %1265 = vrot.lane.b32.xlu0 %v1260, 32
    %v1266 = vpop.permute.xlu0 %1265
    %v1269 = vadd.f32 %v1249, %v1264
    %v1270 = vadd.f32 %v1250, %v1266
    %v1271 = vtanh.pop %v1269
    %v1272 = vtanh.pop %v1270
    %1275 = vrot.lane.b32.xlu0 %v1271, 64
    %v1276 = vpop.permute.xlu0 %1275
    %1277 = vrot.lane.b32.xlu0 %v1272, 64
    %v1278 = vpop.permute.xlu0 %1277
    %v1281 = vmul.f32 %v1238, %v1276
    %v1282 = vmul.f32 %v1240, %v1278
    %v1285 = vrot.slane %v1282, 7
    %vm1286 = vcmask 1046534
    %v1287 = vsel %vm1286, %v1285, %v1281
    %1288 = vrot.lane.b32.xlu0 %v1287, 32
    %v1289 = vpop.permute.xlu0 %1288
    %v1292 = vrot.slane %v1166, 3
    %1293 = vrot.lane.b32.xlu0 %v1292, 64
    %v1294 = vpop.permute.xlu0 %1293
    %v1296 = vsel %vm99, %v1289, %v1294
    %v1297 = vpack.c.bf16 %v1296, %v1296
    %v1299 = vshrl.u32 %v1297, 16
    %v1301 = vrot.slane %v1299, 2
    %v1302 = vshll.u32 %v1297, 16
    %v1304 = vrot.slane %v1302, 3
    %v1305 = vor.u32 %v1301, %v1304
    %v1307 = vsel %vm291, %v1305, 0
    %1309 = vmatprep.subr.bf16.mxu0 0
    %1310 = vmatpush1.bf16.msra.mxu0 0
    %1311 = vmatprep.subr.bf16.mxu0 0
    %1312 = vmatpush1.bf16.msra.mxu0 0
    %1313 = vmatprep.subr.bf16.mxu0 0
    %1314 = vmatpush1.bf16.msra.mxu0 0
    %1315 = vmatprep.subr.bf16.mxu0 0
    %1316 = vmatpush1.bf16.msra.mxu0 0
    %1317 = vmatprep.subr.bf16.mxu0 0
    %1318 = vmatpush1.bf16.msra.mxu0 %v286
    %1319 = vmatprep.subr.bf16.mxu0 0
    %1320 = vmatpush1.bf16.msra.mxu0 %v285
    %1321 = vmatprep.subr.bf16.mxu0 0
    %1322 = vmatpush1.bf16.msra.mxu0 %v284
    %1323 = vmatprep.subr.bf16.mxu0 0
    %1324 = vmatpush1.bf16.msra.mxu0 %v283
    %1325 = vmatprep.subr.bf16.mxu0 0
    %1326 = vmatpush2.bf16.msra.mxu0 0
    %1327 = vmatprep.subr.bf16.mxu0 0
    %1328 = vmatpush2.bf16.msra.mxu0 0
    %1329 = vmatprep.subr.bf16.mxu0 0
    %1330 = vmatpush2.bf16.msra.mxu0 0
    %1331 = vmatprep.subr.bf16.mxu0 0
    %1332 = vmatpush2.bf16.msra.mxu0 0
    %1333 = vmatprep.subr.bf16.mxu0 0
    %1334 = vmatpush2.bf16.msra.mxu0 0
    %1335 = vmatprep.subr.bf16.mxu0 0
    %1336 = vmatpush2.bf16.msra.mxu0 0
    %1337 = vmatprep.subr.bf16.mxu0 0
    %1338 = vmatpush2.bf16.msra.mxu0 0
    %1339 = vmatprep.subr.bf16.mxu0 0
    %1340 = vmatpush2.bf16.msra.mxu0 0
    %1341 = vmatprep.mubr.bf16.mxu0 0
    %1342 = vmatmul.mubr.bf16.gmra.mxu0 %v1307
    %v1343 = vpop.f32.mrf.mxu0
    %v1344 = vadd.f32 %v147, %v1343
    %v1345 = vpop.f32.mrf.mxu0
    %v1346 = vpop.f32.mrf.mxu0
    %v1347 = vpop.f32.mrf.mxu0
    %1348 = vdwg.mxu0
    %v1349 = vxor.u32 %v1344, 2147483648
    %v1350 = vmul.f32 %v1349, 1.442695
    %v1351 = vpow.pop %v1350
    %v1352 = vadd.f32 %v1351, 1.0
    %v1353 = vrcp.pop %v1352
    %v1354 = vmul.f32 1.0, %v1353
    %v1355 = vtanh.pop %v1344
    %v1356 = vmul.f32 %v1354, %v1160
    %1358 = vrot.lane.b32.xlu0 %v1355, 64
    %v1359 = vpop.permute.xlu0 %1358
    %v1361 = vmul.f32 %v1354, %v1359
    %1363 = vrot.lane.b32.xlu0 %v1361, 32
    %v1364 = vpop.permute.xlu0 %1363
    %v1366 = vadd.f32 %v1356, %v1364
    %v1367 = vtanh.pop %v1366
    %1369 = vrot.lane.b32.xlu0 %v1367, 64
    %v1370 = vpop.permute.xlu0 %1369
    %v1372 = vmul.f32 %v1354, %v1370
    %v1373 = vpack.c.bf16 %v1281, %v1281
    %v1374 = vpack.c.bf16 %v1282, %v1282
    %v1377 = vunpack.c.l.b16 %v1373
    %v1378 = vunpack.c.l.b16 %v1374
    %v1379 = vrot.slane %v1377, 5
    %v1380 = vrot.slane %v1378, 4
    %v1381 = vsel %vm260, %v1380, %v1379
    %v1382 = vpack.c.b16 %v1381, %v1381
    %1383 = vrot.lane.b32.xlu0 %v1382, 32
    %v1384 = vpop.permute.xlu0 %1383
    %v1386 = vsel %vm99, %v1384, 0
    %1388 = vmatprep.subr.bf16.mxu0 0
    %1389 = vmatpush1.bf16.msra.mxu0 0
    %1390 = vmatprep.subr.bf16.mxu0 0
    %1391 = vmatpush1.bf16.msra.mxu0 0
    %1392 = vmatprep.subr.bf16.mxu0 0
    %1393 = vmatpush1.bf16.msra.mxu0 0
    %1394 = vmatprep.subr.bf16.mxu0 0
    %1395 = vmatpush1.bf16.msra.mxu0 0
    %1396 = vmatprep.subr.bf16.mxu0 0
    %1397 = vmatpush1.bf16.msra.mxu0 0
    %1398 = vmatprep.subr.bf16.mxu0 0
    %1399 = vmatpush1.bf16.msra.mxu0 0
    %1400 = vmatprep.subr.bf16.mxu0 0
    %1401 = vmatpush1.bf16.msra.mxu0 %v157
    %1402 = vmatprep.subr.bf16.mxu0 0
    %1403 = vmatpush1.bf16.msra.mxu0 %v156
    %1404 = vmatprep.subr.bf16.mxu0 0
    %1405 = vmatpush2.bf16.msra.mxu0 0
    %1406 = vmatprep.subr.bf16.mxu0 0
    %1407 = vmatpush2.bf16.msra.mxu0 0
    %1408 = vmatprep.subr.bf16.mxu0 0
    %1409 = vmatpush2.bf16.msra.mxu0 0
    %1410 = vmatprep.subr.bf16.mxu0 0
    %1411 = vmatpush2.bf16.msra.mxu0 0
    %1412 = vmatprep.subr.bf16.mxu0 0
    %1413 = vmatpush2.bf16.msra.mxu0 0
    %1414 = vmatprep.subr.bf16.mxu0 0
    %1415 = vmatpush2.bf16.msra.mxu0 0
    %1416 = vmatprep.subr.bf16.mxu0 0
    %1417 = vmatpush2.bf16.msra.mxu0 0
    %1418 = vmatprep.subr.bf16.mxu0 0
    %1419 = vmatpush2.bf16.msra.mxu0 0
    %1420 = vmatprep.mubr.bf16.mxu0 0
    %1421 = vmatmul.mubr.bf16.gmra.mxu0 %v1386
    %v1422 = vpop.f32.mrf.mxu0
    %v1423 = vadd.f32 0.0, %v1422
    %v1424 = vpop.f32.mrf.mxu0
    %v1425 = vpop.f32.mrf.mxu0
    %v1426 = vpop.f32.mrf.mxu0
    %1427 = vdwg.mxu0
    %v1429 = vrot.slane %v1423, 2
    %v1430 = vrot.slane %v1423, 3
    %v1433 = vadd.f32 %v138, %v1429
    %v1434 = vadd.f32 %v141, %v1430
    %v1435 = vxor.u32 %v1433, 2147483648
    %v1436 = vxor.u32 %v1434, 2147483648
    %v1437 = vmul.f32 %v1435, 1.442695
    %v1438 = vpow.pop %v1437
    %v1439 = vmul.f32 %v1436, 1.442695
    %v1440 = vpow.pop %v1439
    %v1441 = vadd.f32 %v1438, 1.0
    %v1442 = vadd.f32 %v1440, 1.0
    %v1443 = vrcp.pop %v1441
    %v1444 = vmul.f32 1.0, %v1443
    %v1445 = vrcp.pop %v1442
    %v1446 = vmul.f32 1.0, %v1445
    %v1447 = vtanh.pop %v1433
    %v1448 = vtanh.pop %v1434
    %v1451 = vrot.slane %v1269, 7
    %v1452 = vrot.slane %v1270, 7
    %v1455 = vmul.f32 %v1444, %v1451
    %v1456 = vmul.f32 %v1446, %v1452
    %1459 = vrot.lane.b32.xlu0 %v1447, 64
    %v1460 = vpop.permute.xlu0 %1459
    %1461 = vrot.lane.b32.xlu0 %v1448, 64
    %v1462 = vpop.permute.xlu0 %1461
    %v1465 = vmul.f32 %v1444, %v1460
    %v1466 = vmul.f32 %v1446, %v1462
    %1469 = vrot.lane.b32.xlu0 %v1465, 32
    %v1470 = vpop.permute.xlu0 %1469
    %1471 = vrot.lane.b32.xlu0 %v1466, 32
    %v1472 = vpop.permute.xlu0 %1471
    %v1475 = vadd.f32 %v1455, %v1470
    %v1476 = vadd.f32 %v1456, %v1472
    %v1477 = vtanh.pop %v1475
    %v1478 = vtanh.pop %v1476
    %1481 = vrot.lane.b32.xlu0 %v1477, 64
    %v1482 = vpop.permute.xlu0 %1481
    %1483 = vrot.lane.b32.xlu0 %v1478, 64
    %v1484 = vpop.permute.xlu0 %1483
    %v1487 = vmul.f32 %v1444, %v1482
    %v1488 = vmul.f32 %v1446, %v1484
    %v1491 = vrot.slane %v1488, 7
    %vm1492 = vcmask 1047559
    %v1493 = vsel %vm1492, %v1491, %v1487
    %1494 = vrot.lane.b32.xlu0 %v1493, 32
    %v1495 = vpop.permute.xlu0 %1494
    %v1498 = vrot.slane %v1372, 2
    %1499 = vrot.lane.b32.xlu0 %v1498, 64
    %v1500 = vpop.permute.xlu0 %1499
    %v1502 = vsel %vm99, %v1495, %v1500
    %v1503 = vpack.c.bf16 %v1502, %v1502
    %v1505 = vrot.slane %v1503, 3
    %v1507 = vsel %vm291, %v1505, 0
    %1509 = vmatprep.subr.bf16.mxu0 0
    %1510 = vmatpush1.bf16.msra.mxu0 0
    %1511 = vmatprep.subr.bf16.mxu0 0
    %1512 = vmatpush1.bf16.msra.mxu0 0
    %1513 = vmatprep.subr.bf16.mxu0 0
    %1514 = vmatpush1.bf16.msra.mxu0 0
    %1515 = vmatprep.subr.bf16.mxu0 0
    %1516 = vmatpush1.bf16.msra.mxu0 0
    %1517 = vmatprep.subr.bf16.mxu0 0
    %1518 = vmatpush1.bf16.msra.mxu0 %v286
    %1519 = vmatprep.subr.bf16.mxu0 0
    %1520 = vmatpush1.bf16.msra.mxu0 %v285
    %1521 = vmatprep.subr.bf16.mxu0 0
    %1522 = vmatpush1.bf16.msra.mxu0 %v284
    %1523 = vmatprep.subr.bf16.mxu0 0
    %1524 = vmatpush1.bf16.msra.mxu0 %v283
    %1525 = vmatprep.subr.bf16.mxu0 0
    %1526 = vmatpush2.bf16.msra.mxu0 0
    %1527 = vmatprep.subr.bf16.mxu0 0
    %1528 = vmatpush2.bf16.msra.mxu0 0
    %1529 = vmatprep.subr.bf16.mxu0 0
    %1530 = vmatpush2.bf16.msra.mxu0 0
    %1531 = vmatprep.subr.bf16.mxu0 0
    %1532 = vmatpush2.bf16.msra.mxu0 0
    %1533 = vmatprep.subr.bf16.mxu0 0
    %1534 = vmatpush2.bf16.msra.mxu0 0
    %1535 = vmatprep.subr.bf16.mxu0 0
    %1536 = vmatpush2.bf16.msra.mxu0 0
    %1537 = vmatprep.subr.bf16.mxu0 0
    %1538 = vmatpush2.bf16.msra.mxu0 0
    %1539 = vmatprep.subr.bf16.mxu0 0
    %1540 = vmatpush2.bf16.msra.mxu0 0
    %1541 = vmatprep.mubr.bf16.mxu0 0
    %1542 = vmatmul.mubr.bf16.gmra.mxu0 %v1507
    %v1543 = vpop.f32.mrf.mxu0
    %v1544 = vadd.f32 %v147, %v1543
    %v1545 = vpop.f32.mrf.mxu0
    %v1546 = vpop.f32.mrf.mxu0
    %v1547 = vpop.f32.mrf.mxu0
    %1548 = vdwg.mxu0
    %v1549 = vxor.u32 %v1544, 2147483648
    %v1550 = vmul.f32 %v1549, 1.442695
    %v1551 = vpow.pop %v1550
    %v1552 = vadd.f32 %v1551, 1.0
    %v1553 = vrcp.pop %v1552
    %v1554 = vmul.f32 1.0, %v1553
    %v1555 = vtanh.pop %v1544
    %v1556 = vmul.f32 %v1554, %v1366
    %1558 = vrot.lane.b32.xlu0 %v1555, 64
    %v1559 = vpop.permute.xlu0 %1558
    %v1561 = vmul.f32 %v1554, %v1559
    %1563 = vrot.lane.b32.xlu0 %v1561, 32
    %v1564 = vpop.permute.xlu0 %1563
    %v1566 = vadd.f32 %v1556, %v1564
    %v1567 = vtanh.pop %v1566
    %1569 = vrot.lane.b32.xlu0 %v1567, 64
    %v1570 = vpop.permute.xlu0 %1569
    %v1572 = vmul.f32 %v1554, %v1570
    %v1573 = vpack.c.bf16 %v1487, %v1487
    %v1574 = vpack.c.bf16 %v1488, %v1488
    %v1577 = vunpack.c.l.b16 %v1573
    %v1578 = vunpack.c.l.b16 %v1574
    %v1579 = vrot.slane %v1577, 6
    %v1580 = vrot.slane %v1578, 5
    %v1581 = vsel %vm260, %v1580, %v1579
    %v1582 = vpack.c.b16 %v1581, %v1581
    %1583 = vrot.lane.b32.xlu0 %v1582, 32
    %v1584 = vpop.permute.xlu0 %1583
    %v1586 = vsel %vm99, %v1584, 0
    %1588 = vmatprep.subr.bf16.mxu0 0
    %1589 = vmatpush1.bf16.msra.mxu0 0
    %1590 = vmatprep.subr.bf16.mxu0 0
    %1591 = vmatpush1.bf16.msra.mxu0 0
    %1592 = vmatprep.subr.bf16.mxu0 0
    %1593 = vmatpush1.bf16.msra.mxu0 0
    %1594 = vmatprep.subr.bf16.mxu0 0
    %1595 = vmatpush1.bf16.msra.mxu0 0
    %1596 = vmatprep.subr.bf16.mxu0 0
    %1597 = vmatpush1.bf16.msra.mxu0 0
    %1598 = vmatprep.subr.bf16.mxu0 0
    %1599 = vmatpush1.bf16.msra.mxu0 0
    %1600 = vmatprep.subr.bf16.mxu0 0
    %1601 = vmatpush1.bf16.msra.mxu0 %v157
    %1602 = vmatprep.subr.bf16.mxu0 0
    %1603 = vmatpush1.bf16.msra.mxu0 %v156
    %1604 = vmatprep.subr.bf16.mxu0 0
    %1605 = vmatpush2.bf16.msra.mxu0 0
    %1606 = vmatprep.subr.bf16.mxu0 0
    %1607 = vmatpush2.bf16.msra.mxu0 0
    %1608 = vmatprep.subr.bf16.mxu0 0
    %1609 = vmatpush2.bf16.msra.mxu0 0
    %1610 = vmatprep.subr.bf16.mxu0 0
    %1611 = vmatpush2.bf16.msra.mxu0 0
    %1612 = vmatprep.subr.bf16.mxu0 0
    %1613 = vmatpush2.bf16.msra.mxu0 0
    %1614 = vmatprep.subr.bf16.mxu0 0
    %1615 = vmatpush2.bf16.msra.mxu0 0
    %1616 = vmatprep.subr.bf16.mxu0 0
    %1617 = vmatpush2.bf16.msra.mxu0 0
    %1618 = vmatprep.subr.bf16.mxu0 0
    %1619 = vmatpush2.bf16.msra.mxu0 0
    %1620 = vmatprep.mubr.bf16.mxu0 0
    %1621 = vmatmul.mubr.bf16.gmra.mxu0 %v1586
    %v1622 = vpop.f32.mrf.mxu0
    %v1623 = vadd.f32 0.0, %v1622
    %v1624 = vpop.f32.mrf.mxu0
    %v1625 = vpop.f32.mrf.mxu0
    %v1626 = vpop.f32.mrf.mxu0
    %1627 = vdwg.mxu0
    %v1629 = vrot.slane %v1623, 1
    %v1630 = vrot.slane %v1623, 2
    %v1633 = vadd.f32 %v138, %v1629
    %v1634 = vadd.f32 %v141, %v1630
    %v1635 = vxor.u32 %v1633, 2147483648
    %v1636 = vxor.u32 %v1634, 2147483648
    %v1637 = vmul.f32 %v1635, 1.442695
    %v1638 = vpow.pop %v1637
    %v1639 = vmul.f32 %v1636, 1.442695
    %v1640 = vpow.pop %v1639
    %v1641 = vadd.f32 %v1638, 1.0
    %v1642 = vadd.f32 %v1640, 1.0
    %v1643 = vrcp.pop %v1641
    %v1644 = vmul.f32 1.0, %v1643
    %v1645 = vrcp.pop %v1642
    %v1646 = vmul.f32 1.0, %v1645
    %v1647 = vtanh.pop %v1633
    %v1648 = vtanh.pop %v1634
    %v1651 = vrot.slane %v1475, 7
    %v1652 = vrot.slane %v1476, 7
    %v1655 = vmul.f32 %v1644, %v1651
    %v1656 = vmul.f32 %v1646, %v1652
    %1659 = vrot.lane.b32.xlu0 %v1647, 64
    %v1660 = vpop.permute.xlu0 %1659
    %1661 = vrot.lane.b32.xlu0 %v1648, 64
    %v1662 = vpop.permute.xlu0 %1661
    %v1665 = vmul.f32 %v1644, %v1660
    %v1666 = vmul.f32 %v1646, %v1662
    %1669 = vrot.lane.b32.xlu0 %v1665, 32
    %v1670 = vpop.permute.xlu0 %1669
    %1671 = vrot.lane.b32.xlu0 %v1666, 32
    %v1672 = vpop.permute.xlu0 %1671
    %v1675 = vadd.f32 %v1655, %v1670
    %v1676 = vadd.f32 %v1656, %v1672
    %v1677 = vtanh.pop %v1675
    %v1678 = vtanh.pop %v1676
    %1681 = vrot.lane.b32.xlu0 %v1677, 64
    %v1682 = vpop.permute.xlu0 %1681
    %1683 = vrot.lane.b32.xlu0 %v1678, 64
    %v1684 = vpop.permute.xlu0 %1683
    %v1687 = vmul.f32 %v1644, %v1682
    %v1688 = vmul.f32 %v1646, %v1684
    %v1691 = vrot.slane %v1688, 7
    %1692 = vrot.lane.b32.xlu0 %v1687, 32
    %v1693 = vpop.permute.xlu0 %1692
    %1694 = vrot.lane.b32.xlu0 %v1691, 32
    %v1695 = vpop.permute.xlu0 %1694
    %v1699 = vrot.slane %v1572, 1
    %1700 = vrot.lane.b32.xlu0 %v1699, 64
    %v1701 = vpop.permute.xlu0 %1700
    %v1703 = vsel %vm99, %v1693, %v1701
    %v1704 = vsel %vm99, %v1695, %v1701
    %v1705 = vpack.c.bf16 %v1704, %v1703
    %v1707 = vshrl.u32 %v1705, 16
    %v1709 = vrot.slane %v1707, 3
    %v1710 = vshll.u32 %v1705, 16
    %v1712 = vrot.slane %v1710, 4
    %v1713 = vor.u32 %v1709, %v1712
    %v1715 = vsel %vm291, %v1713, 0
    %1717 = vmatprep.subr.bf16.mxu0 0
    %1718 = vmatpush1.bf16.msra.mxu0 0
    %1719 = vmatprep.subr.bf16.mxu0 0
    %1720 = vmatpush1.bf16.msra.mxu0 0
    %1721 = vmatprep.subr.bf16.mxu0 0
    %1722 = vmatpush1.bf16.msra.mxu0 0
    %1723 = vmatprep.subr.bf16.mxu0 0
    %1724 = vmatpush1.bf16.msra.mxu0 0
    %1725 = vmatprep.subr.bf16.mxu0 0
    %1726 = vmatpush1.bf16.msra.mxu0 %v286
    %1727 = vmatprep.subr.bf16.mxu0 0
    %1728 = vmatpush1.bf16.msra.mxu0 %v285
    %1729 = vmatprep.subr.bf16.mxu0 0
    %1730 = vmatpush1.bf16.msra.mxu0 %v284
    %1731 = vmatprep.subr.bf16.mxu0 0
    %1732 = vmatpush1.bf16.msra.mxu0 %v283
    %1733 = vmatprep.subr.bf16.mxu0 0
    %1734 = vmatpush2.bf16.msra.mxu0 0
    %1735 = vmatprep.subr.bf16.mxu0 0
    %1736 = vmatpush2.bf16.msra.mxu0 0
    %1737 = vmatprep.subr.bf16.mxu0 0
    %1738 = vmatpush2.bf16.msra.mxu0 0
    %1739 = vmatprep.subr.bf16.mxu0 0
    %1740 = vmatpush2.bf16.msra.mxu0 0
    %1741 = vmatprep.subr.bf16.mxu0 0
    %1742 = vmatpush2.bf16.msra.mxu0 0
    %1743 = vmatprep.subr.bf16.mxu0 0
    %1744 = vmatpush2.bf16.msra.mxu0 0
    %1745 = vmatprep.subr.bf16.mxu0 0
    %1746 = vmatpush2.bf16.msra.mxu0 0
    %1747 = vmatprep.subr.bf16.mxu0 0
    %1748 = vmatpush2.bf16.msra.mxu0 0
    %1749 = vmatprep.mubr.bf16.mxu0 0
    %1750 = vmatmul.mubr.bf16.gmra.mxu0 %v1715
    %v1751 = vpop.f32.mrf.mxu0
    %v1752 = vadd.f32 %v147, %v1751
    %v1753 = vpop.f32.mrf.mxu0
    %v1754 = vpop.f32.mrf.mxu0
    %v1755 = vpop.f32.mrf.mxu0
    %1756 = vdwg.mxu0
    %v1757 = vxor.u32 %v1752, 2147483648
    %v1758 = vmul.f32 %v1757, 1.442695
    %v1759 = vpow.pop %v1758
    %v1760 = vadd.f32 %v1759, 1.0
    %v1761 = vrcp.pop %v1760
    %v1762 = vmul.f32 1.0, %v1761
    %v1763 = vtanh.pop %v1752
    %v1764 = vmul.f32 %v1762, %v1566
    %1766 = vrot.lane.b32.xlu0 %v1763, 64
    %v1767 = vpop.permute.xlu0 %1766
    %v1769 = vmul.f32 %v1762, %v1767
    %1771 = vrot.lane.b32.xlu0 %v1769, 32
    %v1772 = vpop.permute.xlu0 %1771
    %v1774 = vadd.f32 %v1764, %v1772
    %v1775 = vtanh.pop %v1774
    %1777 = vrot.lane.b32.xlu0 %v1775, 64
    %v1778 = vpop.permute.xlu0 %1777
    %v1780 = vmul.f32 %v1762, %v1778
    %v1781 = vld [vmem:[#allocation5] sm:$0x1]
    %v1782 = vld [vmem:[#allocation5 + $0x1] sm:$0x1]
    %v1783 = vld [vmem:[#allocation5 + $0x2] sm:$0x1]
    %v1784 = vld [vmem:[#allocation5 + $0x3] sm:$0x1]
    %v1785 = vld [vmem:[#allocation5 + $0x4] sm:$0x1]
    %v1786 = vld [vmem:[#allocation5 + $0x5] sm:$0x1]
    %v1787 = vld [vmem:[#allocation5 + $0x6] sm:$0x1]
    %v1788 = vld [vmem:[#allocation5 + $0x7] sm:$0x1]
    %v1789 = vld [vmem:[%s6] sm:$0xf]
    %v1790 = vld [vmem:[%s6 + $0x4] sm:$0xf]
    %v1791 = vld [vmem:[%s6 + $0x8] sm:$0xf]
    %v1792 = vld [vmem:[%s6 + $0xc] sm:$0xf]
    %v1793 = vld [vmem:[%s6 + $0x10] sm:$0xf]
    %v1794 = vld [vmem:[%s6 + $0x14] sm:$0xf]
    %v1795 = vld [vmem:[%s6 + $0x18] sm:$0xf]
    %v1796 = vld [vmem:[%s6 + $0x1c] sm:$0xf]
    %v1797 = vld [vmem:[%s6 + $0x20] sm:$0xf]
    %v1798 = vld [vmem:[%s6 + $0x24] sm:$0xf]
    %v1799 = vld [vmem:[%s6 + $0x28] sm:$0xf]
    %v1800 = vld [vmem:[%s6 + $0x2c] sm:$0xf]
    %v1801 = vld [vmem:[%s6 + $0x30] sm:$0xf]
    %v1802 = vld [vmem:[%s6 + $0x34] sm:$0xf]
    %v1803 = vld [vmem:[%s6 + $0x38] sm:$0xf]
    %v1804 = vld [vmem:[%s6 + $0x3c] sm:$0xf]
    %v1805 = vld [vmem:[#allocation2] sm:$0x3]
    %1807 = vrot.lane.b32.xlu0 %v1780, 32
    %v1808 = vpop.permute.xlu0 %1807
    %1811 = vrot.lane.b32.xlu0 %v1805, 32
    %v1812 = vpop.permute.xlu0 %1811
    %v1814 = vsel %vm99, %v1808, %v1812
    %v1815 = vpack.c.bf16 %v1814, %v1814
    %v1816 = vlaneseq
    %v1817 = vshrl.u32 %v1816, 7
    %v1818 = vsub.s32 0, %v1817
    %v1819 = vrot.slane %v1781, %v1818
    %v1828 = vunpack.c.l.b16 %v1789
    %v1829 = vunpack.c.l.b16 %v1790
    %v1830 = vunpack.c.l.b16 %v1791
    %v1831 = vunpack.c.l.b16 %v1792
    %v1832 = vunpack.c.l.b16 %v1793
    %v1833 = vunpack.c.l.b16 %v1794
    %v1834 = vunpack.c.l.b16 %v1795
    %v1835 = vunpack.c.l.b16 %v1796
    %v1836 = vpack.c.b16 %v1829, %v1828
    %v1837 = vpack.c.b16 %v1831, %v1830
    %v1838 = vpack.c.b16 %v1833, %v1832
    %v1839 = vpack.c.b16 %v1835, %v1834
    %v1845 = vsel %vm291, %v1815, 0
    %1847 = vmatprep.subr.bf16.mxu0 0
    %1848 = vmatpush1.bf16.msra.mxu0 0
    %1849 = vmatprep.subr.bf16.mxu0 0
    %1850 = vmatpush1.bf16.msra.mxu0 0
    %1851 = vmatprep.subr.bf16.mxu0 0
    %1852 = vmatpush1.bf16.msra.mxu0 0
    %1853 = vmatprep.subr.bf16.mxu0 0
    %1854 = vmatpush1.bf16.msra.mxu0 0
    %1855 = vmatprep.subr.bf16.mxu0 0
    %1856 = vmatpush1.bf16.msra.mxu0 %v1839
    %1857 = vmatprep.subr.bf16.mxu0 0
    %1858 = vmatpush1.bf16.msra.mxu0 %v1838
    %1859 = vmatprep.subr.bf16.mxu0 0
    %1860 = vmatpush1.bf16.msra.mxu0 %v1837
    %1861 = vmatprep.subr.bf16.mxu0 0
    %1862 = vmatpush1.bf16.msra.mxu0 %v1836
    %1863 = vmatprep.subr.bf16.mxu0 0
    %1864 = vmatpush2.bf16.msra.mxu0 0
    %1865 = vmatprep.subr.bf16.mxu0 0
    %1866 = vmatpush2.bf16.msra.mxu0 0
    %1867 = vmatprep.subr.bf16.mxu0 0
    %1868 = vmatpush2.bf16.msra.mxu0 0
    %1869 = vmatprep.subr.bf16.mxu0 0
    %1870 = vmatpush2.bf16.msra.mxu0 0
    %1871 = vmatprep.subr.bf16.mxu0 0
    %1872 = vmatpush2.bf16.msra.mxu0 0
    %1873 = vmatprep.subr.bf16.mxu0 0
    %1874 = vmatpush2.bf16.msra.mxu0 0
    %1875 = vmatprep.subr.bf16.mxu0 0
    %1876 = vmatpush2.bf16.msra.mxu0 0
    %1877 = vmatprep.subr.bf16.mxu0 0
    %1878 = vmatpush2.bf16.msra.mxu0 0
    %1879 = vmatprep.mubr.bf16.mxu0 0
    %1880 = vmatmul.mubr.bf16.gmra.mxu0 %v1845
    %v1881 = vpop.f32.mrf.mxu0
    %v1882 = vadd.f32 %v1819, %v1881
    %v1883 = vpop.f32.mrf.mxu0
    %v1884 = vpop.f32.mrf.mxu0
    %v1885 = vpop.f32.mrf.mxu0
    %1886 = vdwg.mxu0
    %vm1887 = vcmask 254976
    %v1888 = vsel %vm1887, %v1882, 0.0
    %1889 = vadd.xlane.f32.xlu0 %v1888
    %v1890 = vpop.xlane.xlu0 %1889
    %v1891 = vrcp.pop 32.0
    %v1892 = vmul.f32 %v1890, %v1891
    %v1893 = vsub.f32 %v1882, %v1892
    %v1894 = vmul.f32 %v1893, %v1893
    %v1895 = vsel %vm1887, %v1894, 0.0
    %1896 = vadd.xlane.f32.xlu0 %v1895
    %v1897 = vpop.xlane.xlu0 %1896
    %v1898 = vmul.f32 %v1897, %v1891
    %v1899 = vadd.f32 %v1898, 1e-05
    %v1900 = vrsqrt.pop %v1899
    %v1901 = vmul.f32 %v1893, %v1900
    %v1902 = vlaneseq
    %v1903 = vshrl.u32 %v1902, 7
    %v1904 = vsub.s32 0, %v1903
    %v1905 = vrot.slane %v1782, %v1904
    %v1906 = vmul.f32 %v1901, %v1905
    %v1907 = vlaneseq
    %v1908 = vshrl.u32 %v1907, 7
    %v1909 = vsub.s32 0, %v1908
    %v1910 = vrot.slane %v1783, %v1909
    %v1911 = vadd.f32 %v1906, %v1910
    %v1912 = vxor.u32 %v1911, 2147483648
    %v1913 = vmul.f32 %v1912, 1.442695
    %v1914 = vpow.pop %v1913
    %v1915 = vadd.f32 %v1914, 1.0
    %v1916 = vrcp.pop %v1915
    %v1917 = vmul.f32 1.0, %v1916
    %1919 = vrot.lane.b32.xlu0 %v1917, 96
    %v1920 = vpop.permute.xlu0 %1919
    %v1922 = vmul.f32 %v1780, %v1920
    %1924 = vrot.lane.b32.xlu0 %v1922, 32
    %v1925 = vpop.permute.xlu0 %1924
    %1927 = vst.msk [vmem:[#allocation7] sm:$0x3] %vm1887, %v1925
    %v1928 = vpack.c.bf16 %v1922, %v1922
    %v1929 = vlaneseq
    %v1930 = vshrl.u32 %v1929, 7
    %v1931 = vsub.s32 0, %v1930
    %v1932 = vrot.slane %v1784, %v1931
    %1934 = vrot.lane.b32.xlu0 %v1928, 32
    %v1935 = vpop.permute.xlu0 %1934
    %v1940 = vunpack.c.l.b16 %v1797
    %v1941 = vunpack.c.l.b16 %v1798
    %v1942 = vunpack.c.l.b16 %v1799
    %v1943 = vunpack.c.l.b16 %v1800
    %v1944 = vpack.c.b16 %v1941, %v1940
    %v1945 = vpack.c.b16 %v1943, %v1942
    %v1949 = vsel %vm99, %v1935, 0
    %1951 = vmatprep.subr.bf16.mxu0 0
    %1952 = vmatpush1.bf16.msra.mxu0 0
    %1953 = vmatprep.subr.bf16.mxu0 0
    %1954 = vmatpush1.bf16.msra.mxu0 0
    %1955 = vmatprep.subr.bf16.mxu0 0
    %1956 = vmatpush1.bf16.msra.mxu0 0
    %1957 = vmatprep.subr.bf16.mxu0 0
    %1958 = vmatpush1.bf16.msra.mxu0 0
    %1959 = vmatprep.subr.bf16.mxu0 0
    %1960 = vmatpush1.bf16.msra.mxu0 0
    %1961 = vmatprep.subr.bf16.mxu0 0
    %1962 = vmatpush1.bf16.msra.mxu0 0
    %1963 = vmatprep.subr.bf16.mxu0 0
    %1964 = vmatpush1.bf16.msra.mxu0 %v1945
    %1965 = vmatprep.subr.bf16.mxu0 0
    %1966 = vmatpush1.bf16.msra.mxu0 %v1944
    %1967 = vmatprep.subr.bf16.mxu0 0
    %1968 = vmatpush2.bf16.msra.mxu0 0
    %1969 = vmatprep.subr.bf16.mxu0 0
    %1970 = vmatpush2.bf16.msra.mxu0 0
    %1971 = vmatprep.subr.bf16.mxu0 0
    %1972 = vmatpush2.bf16.msra.mxu0 0
    %1973 = vmatprep.subr.bf16.mxu0 0
    %1974 = vmatpush2.bf16.msra.mxu0 0
    %1975 = vmatprep.subr.bf16.mxu0 0
    %1976 = vmatpush2.bf16.msra.mxu0 0
    %1977 = vmatprep.subr.bf16.mxu0 0
    %1978 = vmatpush2.bf16.msra.mxu0 0
    %1979 = vmatprep.subr.bf16.mxu0 0
    %1980 = vmatpush2.bf16.msra.mxu0 0
    %1981 = vmatprep.subr.bf16.mxu0 0
    %1982 = vmatpush2.bf16.msra.mxu0 0
    %1983 = vmatprep.mubr.bf16.mxu0 0
    %1984 = vmatmul.mubr.bf16.gmra.mxu0 %v1949
    %v1985 = vpop.f32.mrf.mxu0
    %v1986 = vadd.f32 %v1932, %v1985
    %v1987 = vpop.f32.mrf.mxu0
    %v1988 = vpop.f32.mrf.mxu0
    %v1989 = vpop.f32.mrf.mxu0
    %1990 = vdwg.mxu0
    %v1991 = vmax.f32 %v1986, 0.0
    %v1992 = vpack.c.bf16 %v1991, %v1991
    %v1993 = vlaneseq
    %v1994 = vshrl.u32 %v1993, 7
    %v1995 = vsub.s32 0, %v1994
    %v1996 = vrot.slane %v1785, %v1995
    %v2001 = vunpack.c.l.b16 %v1801
    %v2002 = vunpack.c.l.b16 %v1802
    %v2003 = vunpack.c.l.b16 %v1803
    %v2004 = vunpack.c.l.b16 %v1804
    %v2005 = vpack.c.b16 %v2002, %v2001
    %v2006 = vpack.c.b16 %v2004, %v2003
    %v2010 = vsel %vm99, %v1992, 0
    %2012 = vmatprep.subr.bf16.mxu0 0
    %2013 = vmatpush1.bf16.msra.mxu0 0
    %2014 = vmatprep.subr.bf16.mxu0 0
    %2015 = vmatpush1.bf16.msra.mxu0 0
    %2016 = vmatprep.subr.bf16.mxu0 0
    %2017 = vmatpush1.bf16.msra.mxu0 0
    %2018 = vmatprep.subr.bf16.mxu0 0
    %2019 = vmatpush1.bf16.msra.mxu0 0
    %2020 = vmatprep.subr.bf16.mxu0 0
    %2021 = vmatpush1.bf16.msra.mxu0 0
    %2022 = vmatprep.subr.bf16.mxu0 0
    %2023 = vmatpush1.bf16.msra.mxu0 0
    %2024 = vmatprep.subr.bf16.mxu0 0
    %2025 = vmatpush1.bf16.msra.mxu0 %v2006
    %2026 = vmatprep.subr.bf16.mxu0 0
    %2027 = vmatpush1.bf16.msra.mxu0 %v2005
    %2028 = vmatprep.subr.bf16.mxu0 0
    %2029 = vmatpush2.bf16.msra.mxu0 0
    %2030 = vmatprep.subr.bf16.mxu0 0
    %2031 = vmatpush2.bf16.msra.mxu0 0
    %2032 = vmatprep.subr.bf16.mxu0 0
    %2033 = vmatpush2.bf16.msra.mxu0 0
    %2034 = vmatprep.subr.bf16.mxu0 0
    %2035 = vmatpush2.bf16.msra.mxu0 0
    %2036 = vmatprep.subr.bf16.mxu0 0
    %2037 = vmatpush2.bf16.msra.mxu0 0
    %2038 = vmatprep.subr.bf16.mxu0 0
    %2039 = vmatpush2.bf16.msra.mxu0 0
    %2040 = vmatprep.subr.bf16.mxu0 0
    %2041 = vmatpush2.bf16.msra.mxu0 0
    %2042 = vmatprep.subr.bf16.mxu0 0
    %2043 = vmatpush2.bf16.msra.mxu0 0
    %2044 = vmatprep.mubr.bf16.mxu0 0
    %2045 = vmatmul.mubr.bf16.gmra.mxu0 %v2010
    %v2046 = vpop.f32.mrf.mxu0
    %v2047 = vadd.f32 %v1996, %v2046
    %v2048 = vpop.f32.mrf.mxu0
    %v2049 = vpop.f32.mrf.mxu0
    %v2050 = vpop.f32.mrf.mxu0
    %2051 = vdwg.mxu0
    %v2052 = vsel %vm1887, %v2047, 0.0
    %2053 = vadd.xlane.f32.xlu0 %v2052
    %v2054 = vpop.xlane.xlu0 %2053
    %v2055 = vmul.f32 %v2054, %v1891
    %v2056 = vsub.f32 %v2047, %v2055
    %v2057 = vmul.f32 %v2056, %v2056
    %v2058 = vsel %vm1887, %v2057, 0.0
    %2059 = vadd.xlane.f32.xlu0 %v2058
    %v2060 = vpop.xlane.xlu0 %2059
    %v2061 = vmul.f32 %v2060, %v1891
    %v2062 = vadd.f32 %v2061, 1e-05
    %v2063 = vrsqrt.pop %v2062
    %v2064 = vmul.f32 %v2056, %v2063
    %v2065 = vlaneseq
    %v2066 = vshrl.u32 %v2065, 7
    %v2067 = vsub.s32 0, %v2066
    %v2068 = vrot.slane %v1786, %v2067
    %v2069 = vmul.f32 %v2064, %v2068
    %v2070 = vlaneseq
    %v2071 = vshrl.u32 %v2070, 7
    %v2072 = vsub.s32 0, %v2071
    %v2073 = vrot.slane %v1787, %v2072
    %v2074 = vadd.f32 %v2069, %v2073
    %v2075 = vxor.u32 %v2074, 2147483648
    %v2076 = vmul.f32 %v2075, 1.442695
    %v2077 = vpow.pop %v2076
    %v2078 = vadd.f32 %v2077, 1.0
    %v2079 = vrcp.pop %v2078
    %v2080 = vmul.f32 1.0, %v2079
    %v2081 = vand.u32 2147483647, %v2080
    %v2082 = vld [vmem:[%s8] sm:$0x1]
    %v2083 = vsel %vm1887, %v2081, 0.0
    %2084 = vadd.xlane.f32.xlu0 %v2083
    %v2085 = vpop.xlane.xlu0 %2084
    %v2086 = vrot.slane %v2085, 4
    %v2087 = vadd.f32 %v2085, %v2086
    %v2088 = vrot.slane %v2087, 2
    %v2089 = vadd.f32 %v2087, %v2088
    %v2090 = vrot.slane %v2089, 1
    %v2091 = vadd.f32 %v2089, %v2090
    %s2092 = vtos %v2091
    %v2093 = vrcp.pop 64.0
    %s2094 = vtos %v2093
    %s2095 = smul.f32 %s2092, %s2094
    %vm2096 = vcmask 8192
    %v2097 = vsel %vm2096, %v2082, 0.0
    %2098 = vadd.xlane.f32.xlu0 %v2097
    %v2099 = vpop.xlane.xlu0 %2098
    %v2100 = vrot.slane %v2099, 4
    %v2101 = vadd.f32 %v2099, %v2100
    %v2102 = vrot.slane %v2101, 2
    %v2103 = vadd.f32 %v2101, %v2102
    %v2104 = vrot.slane %v2103, 1
    %v2105 = vadd.f32 %v2103, %v2104
    %s2106 = vtos %v2105
    %v2107 = vrcp.pop 2.0
    %s2108 = vtos %v2107
    %s2109 = smul.f32 %s2106, %s2108
    %s2110 = ssub.f32 %s2095, %s2109
    %s2111 = smul.f32 %s2110, 0.01
    %v2112 = vstv %s2111
    %v2113 = vadd.f32 %v2082, %v2112
    %2114 = vst.msk [vmem:[#allocation10] sm:$0x1] %vm2096, %v2113
    %v2115 = vrot.slane %v2083, 4
    %v2116 = vadd.f32 %v2083, %v2115
    %v2117 = vrot.slane %v2116, 2
    %v2118 = vadd.f32 %v2116, %v2117
    %v2119 = vrot.slane %v2118, 1
    %v2120 = vadd.f32 %v2118, %v2119
    %v2121 = vrcp.pop 2.0
    %v2122 = vmul.f32 %v2120, %v2121
    %v2123 = vsub.f32 %v2122, %v1788
    %v2124 = vmul.f32 %v2123, 0.01
    %v2125 = vadd.f32 %v1788, %v2124
    %vm2126 = vcmask 253952
    %2127 = vst.msk [vmem:[#allocation8] sm:$0x1] %vm2126, %v2125
    // Predicated region
    $region46: #{adaptive_state_manager.1} parent=1 // pred_check
      _
    $region47: #{adaptive_state_manager.1} parent=1 // pred_check_branch
      %2129 = sbr.rel (0) target = $region49
    $region48: #{adaptive_state_manager.1} parent=1 // pred_region
      %s2131 = ssub.s32 32, 32
      %2132 = vsyncadd [#allocation4], %s2131
      %s2134 = sshll.u32 [#allocation7], 4
      %s2135 = int_to_ptr.vmem [resolvable:$true] %s2134
      %2137 = dma.vmem_to_hbm [thread:$0]  %s2135, 32, %s9, [#allocation4]
    $region49: #{adaptive_state_manager.1} parent=1 // pred_fallthru
      _
    // Predicated region
    $region50: #{adaptive_state_manager.1} parent=1 // pred_check
      _
    $region51: #{adaptive_state_manager.1} parent=1 // pred_check_branch
      %2139 = sbr.rel (0) target = $region53
    $region52: #{adaptive_state_manager.1} parent=1 // pred_region
      %s2141 = ssub.s32 16, 16
      %2142 = vsyncadd [#allocation9], %s2141
      %s2144 = sshll.u32 [#allocation8], 4
      %s2145 = int_to_ptr.vmem [resolvable:$true] %s2144
      %2147 = dma.vmem_to_hbm [thread:$0]  %s2145, 16, %s10, [#allocation9]
    $region53: #{adaptive_state_manager.1} parent=1 // pred_fallthru
      _
    // Predicated region
    $region54: #{adaptive_state_manager.1} parent=1 // pred_check
      _
    $region55: #{adaptive_state_manager.1} parent=1 // pred_check_branch
      %2149 = sbr.rel (0) target = $region57
    $region56: #{adaptive_state_manager.1} parent=1 // pred_region
      %s2151 = ssub.s32 16, 16
      %2152 = vsyncadd [#allocation9], %s2151
      %s2154 = sshll.u32 [#allocation10], 4
      %s2155 = int_to_ptr.vmem [resolvable:$true] %s2154
      %2157 = dma.vmem_to_hbm [thread:$0]  %s2155, 16, %s11, [#allocation9]
    $region57: #{adaptive_state_manager.1} parent=1 // pred_fallthru
      _
    // Predicated region
    $region58: #{adaptive_state_manager.1} parent=1 // pred_check
      _
    $region59: #{adaptive_state_manager.1} parent=1 // pred_check_branch
      %2159 = sbr.rel (0) target = $region61
    $region60: #{adaptive_state_manager.1} parent=1 // pred_region
      %2160 = dma.done [#allocation4], 32
    $region61: #{adaptive_state_manager.1} parent=1 // pred_fallthru
      _
    // Predicated region
    $region62: #{adaptive_state_manager.1} parent=1 // pred_check
      _
    $region63: #{adaptive_state_manager.1} parent=1 // pred_check_branch
      %2162 = sbr.rel (0) target = $region65
    $region64: #{adaptive_state_manager.1} parent=1 // pred_region
      %2163 = dma.done [#allocation9], 16
    $region65: #{adaptive_state_manager.1} parent=1 // pred_fallthru
      _
    // Predicated region
    $region66: #{adaptive_state_manager.1} parent=1 // pred_check
      _
    $region67: #{adaptive_state_manager.1} parent=1 // pred_check_branch
      %2165 = sbr.rel (0) target = $region69
    $region68: #{adaptive_state_manager.1} parent=1 // pred_region
      %2166 = dma.done [#allocation9], 16
    $region69: #{adaptive_state_manager.1} parent=1 // pred_fallthru
      _
    %2167 = vsyncpa [#allocation3], 1
    %2168 = vsyncpa [#allocation6], 1
    %2169 = vsyncpa [#allocation4], 1
    %2170 = vsyncpa [#allocation9], 1

</llo_original>
